<compile_context>
chip_gen: v7x
topology: tpu7x:2x2x1
jax: 0.10.0
libtpu: 0.0.40
codegen_flags: <defaults>
</compile_context>

<pallas_src>
import functools

import jax
import jax.numpy as jnp
from jax import lax
from jax.experimental import pallas as pl
from jax.experimental.pallas import tpu as pltpu

EPS = 1e-5          # PyTorch GroupNorm default eps
_FUSE_K_MAX = 256   # fuse 3 conv taps into one matmul while 3*C <= this


# ------------------------------ kernel helpers ------------------------------

def _conv1d_k3(x, w_fused, bias, keep_m1, keep_p1, *, mm_dtype, cin, k_pad, fuse):
    """k=3 / pad=1 conv over each length-T segment of the lane axis.

    x: [C, L] f32 (L = Bt*T), w_fused: [Rows, 3*C (+pad)] mm_dtype,
    bias: [Rows, 1] f32.  keep_m1/keep_p1: [1, L] f32 edge masks that zero the
    t-1 / t+1 tap at per-sample segment boundaries (so the lane roll doesn't
    leak across samples).  While 3*C underfills the MXU contraction dim the
    three taps are fused into a single matmul; otherwise three accumulating
    dots on the rolled taps."""
    L = x.shape[1]
    x_m1 = pltpu.roll(x, shift=1, axis=1) * keep_m1        # x[:, t-1]
    x_p1 = pltpu.roll(x, shift=L - 1, axis=1) * keep_p1    # x[:, t+1]
    if fuse:
        xk = jnp.concatenate([x_m1, x, x_p1], axis=0).astype(mm_dtype)
        if k_pad:
            xk = jnp.concatenate([xk, jnp.zeros((k_pad, L), mm_dtype)], axis=0)
        h = jnp.dot(w_fused, xk, preferred_element_type=jnp.float32)
    else:
        h = jnp.dot(w_fused[:, :cin], x_m1.astype(mm_dtype),
                    preferred_element_type=jnp.float32)
        h = h + jnp.dot(w_fused[:, cin:2 * cin], x.astype(mm_dtype),
                        preferred_element_type=jnp.float32)
        h = h + jnp.dot(w_fused[:, 2 * cin:3 * cin], x_p1.astype(mm_dtype),
                        preferred_element_type=jnp.float32)
    return h + bias


def _group_norm(h, gamma, beta, M2, MT2, S, ST, *, inv_n, G, Cout):
    """Per-sample GroupNorm on a lane-packed slab in 4 matmuls.

    h: [Cout, L] f32 (L = Bt*T).  M2 = blockdiag(M, M): [2G, 2Cout],
    MT2 = blockdiag(M.T, M.T): [2Cout, 2G], S: [L, Bt], ST: [Bt, L] - all
    exact 0/1 f32.  Single-pass stats in f32 (clamped >= 0), then inv and
    mean*inv broadcast together; normalization is one FMA-style expr on h."""
    f32 = jnp.float32
    stack = jnp.concatenate([h, h * h], axis=0)                     # [2C, L]
    red = jnp.dot(M2, stack, preferred_element_type=f32)            # [2G, L]
    sums = jnp.dot(red, S, preferred_element_type=f32)              # [2G, Bt]
    mean = sums[:G] * inv_n
    var = jnp.maximum(sums[G:] * inv_n - mean * mean, 0.0)
    inv = lax.rsqrt(var + EPS)
    stack2 = jnp.concatenate([inv, mean * inv], axis=0)             # [2G, Bt]
    cs = jnp.dot(MT2, stack2, preferred_element_type=f32)           # [2C, Bt]
    full = jnp.dot(cs, ST, preferred_element_type=f32)              # [2C, L]
    inv_f = full[:Cout]
    meaninv_f = full[Cout:]
    return (h * inv_f - meaninv_f) * gamma + beta


def _mish(x):
    """mish(x) = x*tanh(softplus(x)) = x*(e^2+2e)/(e^2+2e+2), e = exp(x).

    One EUP exp + one approx EUP reciprocal (no full-precision divide).
    For x > 20, mish(x) == x to f32 precision."""
    e = jnp.exp(jnp.minimum(x, 20.0))
    num = e * (e + 2.0)
    y = x * num * pl.reciprocal(num + 2.0, approx=True)
    return jnp.where(x > 20.0, x, y)


# ---------------------------------- kernel -----------------------------------

def _block_kernel(x_ref, w1_ref, b1_ref, g1_ref, be1_ref,
                  w2_ref, b2_ref, g2_ref, be2_ref,
                  m2_ref, mt2_ref, s_ref, st_ref, km1_ref, kp1_ref,
                  out_ref, *, inv_n, mm_dtype, G, Cin, Cout,
                  pad1, pad2, fuse1, fuse2, has_proj):
    x = x_ref[...]                                        # [Cin, L] f32
    km1 = km1_ref[...]
    kp1 = kp1_ref[...]

    # conv1 (+ residual 1x1 conv folded into the same matmul when has_proj)
    hr = _conv1d_k3(x, w1_ref[...], b1_ref[...], km1, kp1,
                    mm_dtype=mm_dtype, cin=Cin, k_pad=pad1, fuse=fuse1)
    if has_proj:
        h = hr[:Cout]
        res = hr[Cout:]
    else:
        h = hr
        res = x                                           # nn.Identity()

    h = _mish(_group_norm(h, g1_ref[...], be1_ref[...], m2_ref[...], mt2_ref[...],
                          s_ref[...], st_ref[...], inv_n=inv_n, G=G, Cout=Cout))
    h = _conv1d_k3(h, w2_ref[...], b2_ref[...], km1, kp1,
                   mm_dtype=mm_dtype, cin=Cout, k_pad=pad2, fuse=fuse2)
    h = _mish(_group_norm(h, g2_ref[...], be2_ref[...], m2_ref[...], mt2_ref[...],
                          s_ref[...], st_ref[...], inv_n=inv_n, G=G, Cout=Cout))

    out_ref[...] = (h + res).astype(out_ref.dtype)


# --------------------------------- wrapper -----------------------------------

def _default_vmem_budget():
    """Per-step VMEM budget, tuned per generation (64 MiB/TC on v7x vs 128 MiB
    on v5e/v6e).  Leave headroom for double-buffering + compiler scratch."""
    try:
        return int(pltpu.get_tpu_info().vmem_capacity_bytes) // 4
    except Exception:
        return 16 << 20


def _step_vmem_bytes(bt, T, cin, cout):
    """Rough per-grid-step VMEM footprint (f32 words per lane x L lanes)."""
    L = bt * T
    per_lane_words = (2 * cin + 2 * cout          # x / out slabs (double-buffered)
                      + 3 * cin + 3 * cout        # conv tap stacks
                      + 4 * cout                  # conv outputs / GN stacks
                      + 4 * cout                  # GN broadcasts / temporaries
                      + 2 * bt                    # S / ST one-hots
                      + 48)                       # masks, misc
    return 4 * L * per_lane_words


def _pick_batch_tile(B, T, cin, cout, target_lanes, vmem_budget):
    """Largest divisor Bt of B with Bt*T a multiple of 128 lanes, <= target_lanes
    and within the VMEM budget.  No ">=2 grid steps" preference: per-step
    overhead (~0.35us) and MXU drain latency dominate at small slabs, so one
    big step beats two small ones.  Falls back to a non-lane-aligned tile
    (masked partial stores, perf-only) if nothing aligned fits."""
    divs = [d for d in range(1, B + 1) if B % d == 0]
    fits = lambda d: _step_vmem_bytes(d, T, cin, cout) <= vmem_budget
    good = [d for d in divs if (d * T) % 128 == 0 and d * T <= target_lanes and fits(d)]
    if good:
        return max(good)
    aligned = [d for d in divs if (d * T) % 128 == 0 and fits(d)]
    if aligned:
        return min(aligned)
    fitting = [d for d in divs if fits(d)]
    return max(fitting) if fitting else 1


def _const_spec(shape):
    n = len(shape)
    return pl.BlockSpec(shape, lambda i: (0,) * n)


def _fuse_conv_w(w, wr, mm_dtype):
    """[3, Co, Ci] -> [Co(+Co), 3*Ci (+pad)] matching the [x(t-1); x(t); x(t+1)]
    sublane order; optional residual rows [0 | Wr | 0] (center tap only);
    contraction dim zero-padded to a multiple of 16 (bf16) / 8 (f32)."""
    k, co, ci = w.shape
    wf = jnp.transpose(w, (1, 0, 2)).reshape(co, k * ci)
    if wr is not None:
        z = jnp.zeros((wr.shape[0], ci), wf.dtype)
        wf = jnp.concatenate([wf, jnp.concatenate([z, wr, z], axis=1)], axis=0)
    kq = 16 if jnp.dtype(mm_dtype).itemsize == 2 else 8
    pad = (-wf.shape[1]) % kq
    if pad:
        wf = jnp.concatenate([wf, jnp.zeros((wf.shape[0], pad), wf.dtype)], axis=1)
    return wf.astype(mm_dtype), pad


def reward_residual_block_1d_packed(x2, params, *, T, n_groups=8,
                                    mm_dtype=jnp.bfloat16, out_dtype=jnp.float32,
                                    batch_tile=None, target_lanes=2048,
                                    vmem_budget=None):
    """Lane-packed entry point: x2 is [Cin, B*T], returns [Cout, B*T].
    Use this directly when stacking blocks (UNet) to avoid the per-block
    [B,C,T] <-> [C,B*T] transposes."""
    Cin, BT = x2.shape
    assert BT % T == 0
    B = BT // T
    Cout = params["w1"].shape[1]
    assert Cout % n_groups == 0, "GroupNorm requires Cout % n_groups == 0"
    cg = Cout // n_groups
    has_proj = "wr" in params
    if not has_proj:
        assert Cin == Cout, "identity residual requires Cin == Cout"

    if vmem_budget is None:
        vmem_budget = _default_vmem_budget()
    Bt = batch_tile if batch_tile is not None else _pick_batch_tile(
        B, T, Cin, Cout, target_lanes, vmem_budget)
    assert B % Bt == 0
    L = Bt * T   # lanes per grid step; when not a multiple of 128, stores are
                 # masked partial stores (correct, just slower)

    col = lambda v: v.reshape(-1, 1).astype(jnp.float32)

    # fused conv weights (+ residual rows folded into conv1 when has_proj)
    w1f, pad1 = _fuse_conv_w(params["w1"], params.get("wr"), mm_dtype)
    w2f, pad2 = _fuse_conv_w(params["w2"], None, mm_dtype)
    fuse1 = 3 * Cin <= _FUSE_K_MAX
    fuse2 = 3 * Cout <= _FUSE_K_MAX
    b1 = params["b1"]
    if has_proj:
        b1 = jnp.concatenate([b1, params["br"]])

    # exact 0/1 one-hot matrices for per-sample GroupNorm stats (block-diagonal
    # so sum(h) / sum(h^2) and inv / mean*inv each take a single matmul pair)
    gidx = jnp.arange(Cout) // cg
    M = (gidx[None, :] == jnp.arange(n_groups)[:, None]).astype(jnp.float32)  # [G,C]
    Zg = jnp.zeros_like(M)
    M2 = jnp.concatenate([jnp.concatenate([M, Zg], axis=1),
                          jnp.concatenate([Zg, M], axis=1)], axis=0)          # [2G,2C]
    MT2 = M2.T                                                                # [2C,2G]
    sidx = jnp.arange(L) // T
    S = (sidx[:, None] == jnp.arange(Bt)[None, :]).astype(jnp.float32)        # [L,Bt]

    # conv boundary masks (hoisted out of the kernel)
    tpos = jnp.arange(L) % T
    keep_m1 = (tpos != 0).astype(jnp.float32)[None, :]
    keep_p1 = (tpos != T - 1).astype(jnp.float32)[None, :]

    n1 = 2 * Cout if has_proj else Cout
    K1 = w1f.shape[1]
    K2 = w2f.shape[1]

    operands = [x2.astype(jnp.float32),
                w1f, col(b1), col(params["g1"]), col(params["beta1"]),
                w2f, col(params["b2"]), col(params["g2"]), col(params["beta2"]),
                M2, MT2, S, S.T, keep_m1, keep_p1]
    in_specs = [pl.BlockSpec((Cin, L), lambda i: (0, i)),
                _const_spec((n1, K1)), _const_spec((n1, 1)),
                _const_spec((Cout, 1)), _const_spec((Cout, 1)),
                _const_spec((Cout, K2)), _const_spec((Cout, 1)),
                _const_spec((Cout, 1)), _const_spec((Cout, 1)),
                _const_spec((2 * n_groups, 2 * Cout)),
                _const_spec((2 * Cout, 2 * n_groups)),
                _const_spec((L, Bt)), _const_spec((Bt, L)),
                _const_spec((1, L)), _const_spec((1, L))]

    kernel = functools.partial(
        _block_kernel, inv_n=1.0 / float(cg * T), mm_dtype=mm_dtype,
        G=n_groups, Cin=Cin, Cout=Cout, pad1=pad1, pad2=pad2,
        fuse1=fuse1, fuse2=fuse2, has_proj=has_proj)

    out2 = pl.pallas_call(
        kernel,
        out_shape=jax.ShapeDtypeStruct((Cout, BT), out_dtype),
        grid=(B // Bt,),
        in_specs=in_specs,
        out_specs=pl.BlockSpec((Cout, L), lambda i: (0, i)),
        compiler_params=pltpu.CompilerParams(
            dimension_semantics=("parallel",),
            vmem_limit_bytes=min(2 * vmem_budget, 96 * 1024 * 1024)),
    )(*operands)
    return out2


@functools.partial(jax.jit, static_argnames=(
    "n_groups", "mm_dtype", "out_dtype", "batch_tile", "target_lanes", "vmem_budget"))
def reward_residual_block_1d(x, params, *, n_groups=8, mm_dtype=jnp.bfloat16,
                             out_dtype=jnp.float32, batch_tile=None,
                             target_lanes=2048, vmem_budget=None):
    """x: [B, Cin, T] -> [B, Cout, T].  jit'ed so the layout plumbing around
    the kernel compiles into one XLA program (for stacked blocks prefer
    reward_residual_block_1d_packed and keep the [C, B*T] layout)."""
    B, Cin, T = x.shape
    x2 = jnp.transpose(x, (1, 0, 2)).reshape(Cin, B * T)
    out2 = reward_residual_block_1d_packed(
        x2, params, T=T, n_groups=n_groups, mm_dtype=mm_dtype,
        out_dtype=out_dtype, batch_tile=batch_tile,
        target_lanes=target_lanes, vmem_budget=vmem_budget)
    Cout = out2.shape[0]
    return out2.reshape(Cout, B, T).transpose(1, 0, 2)


# ---------------------------- params & reference -----------------------------

def init_params(key, in_channels, out_channels):
    """Deterministic synthetic parameters (shapes mirror the torch module).
    Conv1d weights stored as [K, Cout, Cin] (torch is [Cout, Cin, K])."""
    ks = jax.random.split(key, 10)
    p = dict(
        w1=0.1 * jax.random.normal(ks[0], (3, out_channels, in_channels), jnp.float32),
        b1=0.1 * jax.random.normal(ks[1], (out_channels,), jnp.float32),
        g1=1.0 + 0.1 * jax.random.normal(ks[2], (out_channels,), jnp.float32),
        beta1=0.1 * jax.random.normal(ks[3], (out_channels,), jnp.float32),
        w2=0.1 * jax.random.normal(ks[4], (3, out_channels, out_channels), jnp.float32),
        b2=0.1 * jax.random.normal(ks[5], (out_channels,), jnp.float32),
        g2=1.0 + 0.1 * jax.random.normal(ks[6], (out_channels,), jnp.float32),
        beta2=0.1 * jax.random.normal(ks[7], (out_channels,), jnp.float32),
    )
    if in_channels != out_channels:
        p["wr"] = 0.1 * jax.random.normal(ks[8], (out_channels, in_channels), jnp.float32)
        p["br"] = 0.1 * jax.random.normal(ks[9], (out_channels,), jnp.float32)
    return p


def _ref_forward(x, p, n_groups, mm_dtype=None):
    """Pure-JAX reference.  If mm_dtype is given, matmul operands are cast to it
    (mirroring the kernel's bf16-MXU / f32-accumulate precision contract)."""
    cast = (lambda a: a.astype(mm_dtype)) if mm_dtype is not None else (lambda a: a)

    def conv3(xx, w, b):
        xp = jnp.pad(xx, ((0, 0), (0, 0), (1, 1)))
        taps = (xp[:, :, :-2], xp[:, :, 1:-1], xp[:, :, 2:])
        out = sum(jnp.einsum("oc,bct->bot", cast(w[k]), cast(taps[k]),
                             preferred_element_type=jnp.float32) for k in range(3))
        return out + b[None, :, None]

    def gn(h, g, be):
        bb, c, tt = h.shape
        hg = h.reshape(bb, n_groups, -1)
        m = hg.mean(-1, keepdims=True)
        v = ((hg - m) ** 2).mean(-1, keepdims=True)
        hn = ((hg - m) * lax.rsqrt(v + EPS)).reshape(bb, c, tt)
        return hn * g[None, :, None] + be[None, :, None]

    def mish(z):
        return z * jnp.tanh(jax.nn.softplus(z))

    h = mish(gn(conv3(x, p["w1"], p["b1"]), p["g1"], p["beta1"]))
    h = mish(gn(conv3(h, p["w2"], p["b2"]), p["g2"], p["beta2"]))
    if "wr" in p:
        res = jnp.einsum("oc,bct->bot", cast(p["wr"]), cast(x),
                         preferred_element_type=jnp.float32) + p["br"][None, :, None]
    else:
        res = x
    return h + res


# ------------------------------------ main ------------------------------------

if __name__ == "__main__":
    B, T, N_GROUPS = 16, 16, 8
    key = jax.random.PRNGKey(0)
    kx1, kp1, kx2, kp2 = jax.random.split(key, 4)

    # Case 1: Cin != Cout  -> residual 1x1 conv folded into conv1's matmul.
    CIN, COUT = 8, 16
    x = jax.random.normal(kx1, (B, CIN, T), jnp.float32)
    params = init_params(kp1, CIN, COUT)
    out = jax.block_until_ready(reward_residual_block_1d(x, params, n_groups=N_GROUPS))
    assert out.shape == (B, COUT, T)
    ref = _ref_forward(x, params, N_GROUPS, mm_dtype=jnp.bfloat16)
    err = float(jnp.max(jnp.abs(out - ref)))
    assert jnp.allclose(out, ref, atol=2e-2, rtol=2e-2), f"proj path max err {err}"
    err32 = float(jnp.max(jnp.abs(out - _ref_forward(x, params, N_GROUPS))))
    assert err32 < 0.25, f"bf16-MXU precision drift too large: {err32}"

    # Case 2: Cin == Cout -> identity residual (no 1x1 matmul in-kernel).
    C = 16
    x_i = jax.random.normal(kx2, (B, C, T), jnp.float32)
    params_i = init_params(kp2, C, C)
    out_i = jax.block_until_ready(reward_residual_block_1d(x_i, params_i, n_groups=N_GROUPS))
    ref_i = _ref_forward(x_i, params_i, N_GROUPS, mm_dtype=jnp.bfloat16)
    err_i = float(jnp.max(jnp.abs(out_i - ref_i)))
    assert jnp.allclose(out_i, ref_i, atol=2e-2, rtol=2e-2), f"identity path max err {err_i}"

    print("KERNEL_OK")
</pallas_src>

<mosaic_0001>
module attributes {stable_mosaic.version = 11 : i64} {
  func.func @_block_kernel(%arg0: i32, %arg1: memref<8x256xf32, #tpu.memory_space<vmem>>, %arg2: memref<32x32xbf16, #tpu.memory_space<vmem>>, %arg3: memref<32x1xf32, #tpu.memory_space<vmem>>, %arg4: memref<16x1xf32, #tpu.memory_space<vmem>>, %arg5: memref<16x1xf32, #tpu.memory_space<vmem>>, %arg6: memref<16x48xbf16, #tpu.memory_space<vmem>>, %arg7: memref<16x1xf32, #tpu.memory_space<vmem>>, %arg8: memref<16x1xf32, #tpu.memory_space<vmem>>, %arg9: memref<16x1xf32, #tpu.memory_space<vmem>>, %arg10: memref<16x32xf32, #tpu.memory_space<vmem>>, %arg11: memref<32x16xf32, #tpu.memory_space<vmem>>, %arg12: memref<256x16xf32, #tpu.memory_space<vmem>>, %arg13: memref<16x256xf32, #tpu.memory_space<vmem>>, %arg14: memref<1x256xf32, #tpu.memory_space<vmem>>, %arg15: memref<1x256xf32, #tpu.memory_space<vmem>>, %arg16: memref<16x256xf32, #tpu.memory_space<vmem>>) attributes {dimension_semantics = [#tpu.dimension_semantics<parallel>], iteration_bounds = array<i64: 1>, scalar_prefetch = 0 : i64, scratch_operands = 0 : i64, tpu.core_type = #tpu.core_type<tc>, window_params = [{transform_indices = @transform_0, window_bounds = array<i64: 8, 256>}, {pipeline_mode = #tpu.pipeline_mode<synchronous>, transform_indices = @transform_1, window_bounds = array<i64: 32, 32>}, {pipeline_mode = #tpu.pipeline_mode<synchronous>, transform_indices = @transform_2, window_bounds = array<i64: 32, 1>}, {pipeline_mode = #tpu.pipeline_mode<synchronous>, transform_indices = @transform_3, window_bounds = array<i64: 16, 1>}, {pipeline_mode = #tpu.pipeline_mode<synchronous>, transform_indices = @transform_4, window_bounds = array<i64: 16, 1>}, {pipeline_mode = #tpu.pipeline_mode<synchronous>, transform_indices = @transform_5, window_bounds = array<i64: 16, 48>}, {pipeline_mode = #tpu.pipeline_mode<synchronous>, transform_indices = @transform_6, window_bounds = array<i64: 16, 1>}, {pipeline_mode = #tpu.pipeline_mode<synchronous>, transform_indices = @transform_7, window_bounds = array<i64: 16, 1>}, {pipeline_mode = #tpu.pipeline_mode<synchronous>, transform_indices = @transform_8, window_bounds = array<i64: 16, 1>}, {pipeline_mode = #tpu.pipeline_mode<synchronous>, transform_indices = @transform_9, window_bounds = array<i64: 16, 32>}, {pipeline_mode = #tpu.pipeline_mode<synchronous>, transform_indices = @transform_10, window_bounds = array<i64: 32, 16>}, {pipeline_mode = #tpu.pipeline_mode<synchronous>, transform_indices = @transform_11, window_bounds = array<i64: 256, 16>}, {pipeline_mode = #tpu.pipeline_mode<synchronous>, transform_indices = @transform_12, window_bounds = array<i64: 16, 256>}, {pipeline_mode = #tpu.pipeline_mode<synchronous>, transform_indices = @transform_13, window_bounds = array<i64: 1, 256>}, {pipeline_mode = #tpu.pipeline_mode<synchronous>, transform_indices = @transform_14, window_bounds = array<i64: 1, 256>}, {transform_indices = @transform_15, window_bounds = array<i64: 16, 256>}]} {
    %c0 = arith.constant 0 : index
    %c0_0 = arith.constant 0 : index
    %0 = vector.load %arg1[%c0, %c0_0] : memref<8x256xf32, #tpu.memory_space<vmem>>, vector<8x256xf32>
    %c0_1 = arith.constant 0 : index
    %c0_2 = arith.constant 0 : index
    %1 = vector.load %arg14[%c0_1, %c0_2] : memref<1x256xf32, #tpu.memory_space<vmem>>, vector<1x256xf32>
    %c0_3 = arith.constant 0 : index
    %c0_4 = arith.constant 0 : index
    %2 = vector.load %arg15[%c0_3, %c0_4] : memref<1x256xf32, #tpu.memory_space<vmem>>, vector<1x256xf32>
    %c0_5 = arith.constant 0 : index
    %c0_6 = arith.constant 0 : index
    %3 = vector.load %arg2[%c0_5, %c0_6] : memref<32x32xbf16, #tpu.memory_space<vmem>>, vector<32x32xbf16>
    %c0_7 = arith.constant 0 : index
    %c0_8 = arith.constant 0 : index
    %4 = vector.load %arg3[%c0_7, %c0_8] : memref<32x1xf32, #tpu.memory_space<vmem>>, vector<32x1xf32>
    %c1_i32 = arith.constant 1 : i32
    %5 = tpu.dynamic_rotate %0 by %c1_i32 dim 1 : vector<8x256xf32>, i32 -> vector<8x256xf32>
    %6 = vector.broadcast %1 : vector<1x256xf32> to vector<8x256xf32>
    %7 = arith.mulf %5, %6 : vector<8x256xf32>
    %c255_i32 = arith.constant 255 : i32
    %8 = tpu.dynamic_rotate %0 by %c255_i32 dim 1 : vector<8x256xf32>, i32 -> vector<8x256xf32>
    %9 = vector.broadcast %2 : vector<1x256xf32> to vector<8x256xf32>
    %10 = arith.mulf %8, %9 : vector<8x256xf32>
    %11 = tpu.concatenate %7, %0, %10 in 0 : vector<8x256xf32>, vector<8x256xf32>, vector<8x256xf32> -> vector<24x256xf32>
    %12 = arith.truncf %11 : vector<24x256xf32> to vector<24x256xbf16>
    %cst = arith.constant 0.000000e+00 : bf16
    %13 = vector.broadcast %cst : bf16 to vector<8x256xbf16>
    %14 = tpu.concatenate %12, %13 in 0 : vector<24x256xbf16>, vector<8x256xbf16> -> vector<32x256xbf16>
    %cst_9 = arith.constant dense<0.000000e+00> : vector<32x256xf32>
    %15 = tpu.matmul %3, %14, %cst_9 {dimension_numbers = #tpu.dot_dimension_numbers<[1], [0], [0], [1], [0, 0, 1, 1], [], []>} : vector<32x32xbf16>, vector<32x256xbf16>, vector<32x256xf32> -> vector<32x256xf32>
    %16 = vector.broadcast %4 : vector<32x1xf32> to vector<32x256xf32>
    %17 = arith.addf %15, %16 : vector<32x256xf32>
    %18 = vector.extract_strided_slice %17 {offsets = [0, 0], sizes = [16, 256], strides = [1, 1]} : vector<32x256xf32> to vector<16x256xf32>
    %19 = vector.extract_strided_slice %17 {offsets = [16, 0], sizes = [16, 256], strides = [1, 1]} : vector<32x256xf32> to vector<16x256xf32>
    %c0_10 = arith.constant 0 : index
    %c0_11 = arith.constant 0 : index
    %20 = vector.load %arg4[%c0_10, %c0_11] : memref<16x1xf32, #tpu.memory_space<vmem>>, vector<16x1xf32>
    %c0_12 = arith.constant 0 : index
    %c0_13 = arith.constant 0 : index
    %21 = vector.load %arg5[%c0_12, %c0_13] : memref<16x1xf32, #tpu.memory_space<vmem>>, vector<16x1xf32>
    %c0_14 = arith.constant 0 : index
    %c0_15 = arith.constant 0 : index
    %22 = vector.load %arg10[%c0_14, %c0_15] : memref<16x32xf32, #tpu.memory_space<vmem>>, vector<16x32xf32>
    %c0_16 = arith.constant 0 : index
    %c0_17 = arith.constant 0 : index
    %23 = vector.load %arg11[%c0_16, %c0_17] : memref<32x16xf32, #tpu.memory_space<vmem>>, vector<32x16xf32>
    %c0_18 = arith.constant 0 : index
    %c0_19 = arith.constant 0 : index
    %24 = vector.load %arg12[%c0_18, %c0_19] : memref<256x16xf32, #tpu.memory_space<vmem>>, vector<256x16xf32>
    %c0_20 = arith.constant 0 : index
    %c0_21 = arith.constant 0 : index
    %25 = vector.load %arg13[%c0_20, %c0_21] : memref<16x256xf32, #tpu.memory_space<vmem>>, vector<16x256xf32>
    %26 = arith.mulf %18, %18 : vector<16x256xf32>
    %27 = tpu.concatenate %18, %26 in 0 : vector<16x256xf32>, vector<16x256xf32> -> vector<32x256xf32>
    %cst_22 = arith.constant dense<0.000000e+00> : vector<16x256xf32>
    %28 = tpu.matmul %22, %27, %cst_22 {dimension_numbers = #tpu.dot_dimension_numbers<[1], [0], [0], [1], [0, 0, 1, 1], [], []>} : vector<16x32xf32>, vector<32x256xf32>, vector<16x256xf32> -> vector<16x256xf32>
    %cst_23 = arith.constant dense<0.000000e+00> : vector<16x16xf32>
    %29 = tpu.matmul %28, %24, %cst_23 {dimension_numbers = #tpu.dot_dimension_numbers<[1], [0], [0], [1], [0, 0, 1, 1], [], []>} : vector<16x256xf32>, vector<256x16xf32>, vector<16x16xf32> -> vector<16x16xf32>
    %30 = vector.extract_strided_slice %29 {offsets = [0, 0], sizes = [8, 16], strides = [1, 1]} : vector<16x16xf32> to vector<8x16xf32>
    %cst_24 = arith.constant 3.125000e-02 : f32
    %31 = vector.broadcast %cst_24 : f32 to vector<8x16xf32>
    %32 = arith.mulf %30, %31 : vector<8x16xf32>
    %33 = vector.extract_strided_slice %29 {offsets = [8, 0], sizes = [8, 16], strides = [1, 1]} : vector<16x16xf32> to vector<8x16xf32>
    %cst_25 = arith.constant 3.125000e-02 : f32
    %34 = vector.broadcast %cst_25 : f32 to vector<8x16xf32>
    %35 = arith.mulf %33, %34 : vector<8x16xf32>
    %36 = arith.mulf %32, %32 : vector<8x16xf32>
    %37 = arith.subf %35, %36 : vector<8x16xf32>
    %cst_26 = arith.constant 0.000000e+00 : f32
    %38 = vector.broadcast %cst_26 : f32 to vector<8x16xf32>
    %39 = arith.maximumf %37, %38 : vector<8x16xf32>
    %cst_27 = arith.constant 9.99999974E-6 : f32
    %40 = vector.broadcast %cst_27 : f32 to vector<8x16xf32>
    %41 = arith.addf %39, %40 : vector<8x16xf32>
    %42 = math.rsqrt %41 : vector<8x16xf32>
    %43 = arith.mulf %32, %42 : vector<8x16xf32>
    %44 = tpu.concatenate %42, %43 in 0 : vector<8x16xf32>, vector<8x16xf32> -> vector<16x16xf32>
    %cst_28 = arith.constant dense<0.000000e+00> : vector<32x16xf32>
    %45 = tpu.matmul %23, %44, %cst_28 {dimension_numbers = #tpu.dot_dimension_numbers<[1], [0], [0], [1], [0, 0, 1, 1], [], []>} : vector<32x16xf32>, vector<16x16xf32>, vector<32x16xf32> -> vector<32x16xf32>
    %cst_29 = arith.constant dense<0.000000e+00> : vector<32x256xf32>
    %46 = tpu.matmul %45, %25, %cst_29 {dimension_numbers = #tpu.dot_dimension_numbers<[1], [0], [0], [1], [0, 0, 1, 1], [], []>} : vector<32x16xf32>, vector<16x256xf32>, vector<32x256xf32> -> vector<32x256xf32>
    %47 = vector.extract_strided_slice %46 {offsets = [0, 0], sizes = [16, 256], strides = [1, 1]} : vector<32x256xf32> to vector<16x256xf32>
    %48 = vector.extract_strided_slice %46 {offsets = [16, 0], sizes = [16, 256], strides = [1, 1]} : vector<32x256xf32> to vector<16x256xf32>
    %49 = arith.mulf %18, %47 : vector<16x256xf32>
    %50 = arith.subf %49, %48 : vector<16x256xf32>
    %51 = vector.broadcast %20 : vector<16x1xf32> to vector<16x256xf32>
    %52 = arith.mulf %50, %51 : vector<16x256xf32>
    %53 = vector.broadcast %21 : vector<16x1xf32> to vector<16x256xf32>
    %54 = arith.addf %52, %53 : vector<16x256xf32>
    %cst_30 = arith.constant 2.000000e+01 : f32
    %55 = vector.broadcast %cst_30 : f32 to vector<16x256xf32>
    %56 = arith.minimumf %54, %55 : vector<16x256xf32>
    %57 = math.exp %56 : vector<16x256xf32>
    %cst_31 = arith.constant 2.000000e+00 : f32
    %58 = vector.broadcast %cst_31 : f32 to vector<16x256xf32>
    %59 = arith.addf %57, %58 : vector<16x256xf32>
    %60 = arith.mulf %57, %59 : vector<16x256xf32>
    %61 = arith.mulf %54, %60 : vector<16x256xf32>
    %cst_32 = arith.constant 2.000000e+00 : f32
    %62 = vector.broadcast %cst_32 : f32 to vector<16x256xf32>
    %63 = arith.addf %60, %62 : vector<16x256xf32>
    %64 = tpu.reciprocal %63 {approx = true} : vector<16x256xf32> -> vector<16x256xf32>
    %65 = arith.mulf %61, %64 : vector<16x256xf32>
    %cst_33 = arith.constant 2.000000e+01 : f32
    %66 = vector.broadcast %cst_33 : f32 to vector<16x256xf32>
    %67 = arith.cmpf ogt, %54, %66 : vector<16x256xf32>
    %68 = arith.select %67, %54, %65 : vector<16x256xi1>, vector<16x256xf32>
    %c0_34 = arith.constant 0 : index
    %c0_35 = arith.constant 0 : index
    %69 = vector.load %arg6[%c0_34, %c0_35] : memref<16x48xbf16, #tpu.memory_space<vmem>>, vector<16x48xbf16>
    %c0_36 = arith.constant 0 : index
    %c0_37 = arith.constant 0 : index
    %70 = vector.load %arg7[%c0_36, %c0_37] : memref<16x1xf32, #tpu.memory_space<vmem>>, vector<16x1xf32>
    %c1_i32_38 = arith.constant 1 : i32
    %71 = tpu.dynamic_rotate %68 by %c1_i32_38 dim 1 : vector<16x256xf32>, i32 -> vector<16x256xf32>
    %72 = vector.broadcast %1 : vector<1x256xf32> to vector<16x256xf32>
    %73 = arith.mulf %71, %72 : vector<16x256xf32>
    %c255_i32_39 = arith.constant 255 : i32
    %74 = tpu.dynamic_rotate %68 by %c255_i32_39 dim 1 : vector<16x256xf32>, i32 -> vector<16x256xf32>
    %75 = vector.broadcast %2 : vector<1x256xf32> to vector<16x256xf32>
    %76 = arith.mulf %74, %75 : vector<16x256xf32>
    %77 = tpu.concatenate %73, %68, %76 in 0 : vector<16x256xf32>, vector<16x256xf32>, vector<16x256xf32> -> vector<48x256xf32>
    %78 = arith.truncf %77 : vector<48x256xf32> to vector<48x256xbf16>
    %cst_40 = arith.constant dense<0.000000e+00> : vector<16x256xf32>
    %79 = tpu.matmul %69, %78, %cst_40 {dimension_numbers = #tpu.dot_dimension_numbers<[1], [0], [0], [1], [0, 0, 1, 1], [], []>} : vector<16x48xbf16>, vector<48x256xbf16>, vector<16x256xf32> -> vector<16x256xf32>
    %80 = vector.broadcast %70 : vector<16x1xf32> to vector<16x256xf32>
    %81 = arith.addf %79, %80 : vector<16x256xf32>
    %c0_41 = arith.constant 0 : index
    %c0_42 = arith.constant 0 : index
    %82 = vector.load %arg8[%c0_41, %c0_42] : memref<16x1xf32, #tpu.memory_space<vmem>>, vector<16x1xf32>
    %c0_43 = arith.constant 0 : index
    %c0_44 = arith.constant 0 : index
    %83 = vector.load %arg9[%c0_43, %c0_44] : memref<16x1xf32, #tpu.memory_space<vmem>>, vector<16x1xf32>
    %c0_45 = arith.constant 0 : index
    %c0_46 = arith.constant 0 : index
    %84 = vector.load %arg10[%c0_45, %c0_46] : memref<16x32xf32, #tpu.memory_space<vmem>>, vector<16x32xf32>
    %c0_47 = arith.constant 0 : index
    %c0_48 = arith.constant 0 : index
    %85 = vector.load %arg11[%c0_47, %c0_48] : memref<32x16xf32, #tpu.memory_space<vmem>>, vector<32x16xf32>
    %c0_49 = arith.constant 0 : index
    %c0_50 = arith.constant 0 : index
    %86 = vector.load %arg12[%c0_49, %c0_50] : memref<256x16xf32, #tpu.memory_space<vmem>>, vector<256x16xf32>
    %c0_51 = arith.constant 0 : index
    %c0_52 = arith.constant 0 : index
    %87 = vector.load %arg13[%c0_51, %c0_52] : memref<16x256xf32, #tpu.memory_space<vmem>>, vector<16x256xf32>
    %88 = arith.mulf %81, %81 : vector<16x256xf32>
    %89 = tpu.concatenate %81, %88 in 0 : vector<16x256xf32>, vector<16x256xf32> -> vector<32x256xf32>
    %cst_53 = arith.constant dense<0.000000e+00> : vector<16x256xf32>
    %90 = tpu.matmul %84, %89, %cst_53 {dimension_numbers = #tpu.dot_dimension_numbers<[1], [0], [0], [1], [0, 0, 1, 1], [], []>} : vector<16x32xf32>, vector<32x256xf32>, vector<16x256xf32> -> vector<16x256xf32>
    %cst_54 = arith.constant dense<0.000000e+00> : vector<16x16xf32>
    %91 = tpu.matmul %90, %86, %cst_54 {dimension_numbers = #tpu.dot_dimension_numbers<[1], [0], [0], [1], [0, 0, 1, 1], [], []>} : vector<16x256xf32>, vector<256x16xf32>, vector<16x16xf32> -> vector<16x16xf32>
    %92 = vector.extract_strided_slice %91 {offsets = [0, 0], sizes = [8, 16], strides = [1, 1]} : vector<16x16xf32> to vector<8x16xf32>
    %cst_55 = arith.constant 3.125000e-02 : f32
    %93 = vector.broadcast %cst_55 : f32 to vector<8x16xf32>
    %94 = arith.mulf %92, %93 : vector<8x16xf32>
    %95 = vector.extract_strided_slice %91 {offsets = [8, 0], sizes = [8, 16], strides = [1, 1]} : vector<16x16xf32> to vector<8x16xf32>
    %cst_56 = arith.constant 3.125000e-02 : f32
    %96 = vector.broadcast %cst_56 : f32 to vector<8x16xf32>
    %97 = arith.mulf %95, %96 : vector<8x16xf32>
    %98 = arith.mulf %94, %94 : vector<8x16xf32>
    %99 = arith.subf %97, %98 : vector<8x16xf32>
    %cst_57 = arith.constant 0.000000e+00 : f32
    %100 = vector.broadcast %cst_57 : f32 to vector<8x16xf32>
    %101 = arith.maximumf %99, %100 : vector<8x16xf32>
    %cst_58 = arith.constant 9.99999974E-6 : f32
    %102 = vector.broadcast %cst_58 : f32 to vector<8x16xf32>
    %103 = arith.addf %101, %102 : vector<8x16xf32>
    %104 = math.rsqrt %103 : vector<8x16xf32>
    %105 = arith.mulf %94, %104 : vector<8x16xf32>
    %106 = tpu.concatenate %104, %105 in 0 : vector<8x16xf32>, vector<8x16xf32> -> vector<16x16xf32>
    %cst_59 = arith.constant dense<0.000000e+00> : vector<32x16xf32>
    %107 = tpu.matmul %85, %106, %cst_59 {dimension_numbers = #tpu.dot_dimension_numbers<[1], [0], [0], [1], [0, 0, 1, 1], [], []>} : vector<32x16xf32>, vector<16x16xf32>, vector<32x16xf32> -> vector<32x16xf32>
    %cst_60 = arith.constant dense<0.000000e+00> : vector<32x256xf32>
    %108 = tpu.matmul %107, %87, %cst_60 {dimension_numbers = #tpu.dot_dimension_numbers<[1], [0], [0], [1], [0, 0, 1, 1], [], []>} : vector<32x16xf32>, vector<16x256xf32>, vector<32x256xf32> -> vector<32x256xf32>
    %109 = vector.extract_strided_slice %108 {offsets = [0, 0], sizes = [16, 256], strides = [1, 1]} : vector<32x256xf32> to vector<16x256xf32>
    %110 = vector.extract_strided_slice %108 {offsets = [16, 0], sizes = [16, 256], strides = [1, 1]} : vector<32x256xf32> to vector<16x256xf32>
    %111 = arith.mulf %81, %109 : vector<16x256xf32>
    %112 = arith.subf %111, %110 : vector<16x256xf32>
    %113 = vector.broadcast %82 : vector<16x1xf32> to vector<16x256xf32>
    %114 = arith.mulf %112, %113 : vector<16x256xf32>
    %115 = vector.broadcast %83 : vector<16x1xf32> to vector<16x256xf32>
    %116 = arith.addf %114, %115 : vector<16x256xf32>
    %cst_61 = arith.constant 2.000000e+01 : f32
    %117 = vector.broadcast %cst_61 : f32 to vector<16x256xf32>
    %118 = arith.minimumf %116, %117 : vector<16x256xf32>
    %119 = math.exp %118 : vector<16x256xf32>
    %cst_62 = arith.constant 2.000000e+00 : f32
    %120 = vector.broadcast %cst_62 : f32 to vector<16x256xf32>
    %121 = arith.addf %119, %120 : vector<16x256xf32>
    %122 = arith.mulf %119, %121 : vector<16x256xf32>
    %123 = arith.mulf %116, %122 : vector<16x256xf32>
    %cst_63 = arith.constant 2.000000e+00 : f32
    %124 = vector.broadcast %cst_63 : f32 to vector<16x256xf32>
    %125 = arith.addf %122, %124 : vector<16x256xf32>
    %126 = tpu.reciprocal %125 {approx = true} : vector<16x256xf32> -> vector<16x256xf32>
    %127 = arith.mulf %123, %126 : vector<16x256xf32>
    %cst_64 = arith.constant 2.000000e+01 : f32
    %128 = vector.broadcast %cst_64 : f32 to vector<16x256xf32>
    %129 = arith.cmpf ogt, %116, %128 : vector<16x256xf32>
    %130 = arith.select %129, %116, %127 : vector<16x256xi1>, vector<16x256xf32>
    %131 = arith.addf %130, %19 : vector<16x256xf32>
    %c0_65 = arith.constant 0 : index
    %c0_66 = arith.constant 0 : index
    %132 = vector.load %arg16[%c0_65, %c0_66] : memref<16x256xf32, #tpu.memory_space<vmem>>, vector<16x256xf32>
    tpu.vector_store %arg16[%c0_65, %c0_66], %131 {strides = array<i32>} : memref<16x256xf32, #tpu.memory_space<vmem>>, vector<16x256xf32>,
    return
  }
  func.func @transform_0(%arg0: i32) -> (i32, i32) {
    %c0_i32 = arith.constant 0 : i32
    %c0_i32_0 = arith.constant 0 : i32
    return %c0_i32, %arg0 : i32, i32
  }
  func.func @transform_1(%arg0: i32) -> (i32, i32) {
    %c0_i32 = arith.constant 0 : i32
    %c0_i32_0 = arith.constant 0 : i32
    %c0_i32_1 = arith.constant 0 : i32
    return %c0_i32, %c0_i32_0 : i32, i32
  }
  func.func @transform_2(%arg0: i32) -> (i32, i32) {
    %c0_i32 = arith.constant 0 : i32
    %c0_i32_0 = arith.constant 0 : i32
    %c0_i32_1 = arith.constant 0 : i32
    return %c0_i32, %c0_i32_0 : i32, i32
  }
  func.func @transform_3(%arg0: i32) -> (i32, i32) {
    %c0_i32 = arith.constant 0 : i32
    %c0_i32_0 = arith.constant 0 : i32
    %c0_i32_1 = arith.constant 0 : i32
    return %c0_i32, %c0_i32_0 : i32, i32
  }
  func.func @transform_4(%arg0: i32) -> (i32, i32) {
    %c0_i32 = arith.constant 0 : i32
    %c0_i32_0 = arith.constant 0 : i32
    %c0_i32_1 = arith.constant 0 : i32
    return %c0_i32, %c0_i32_0 : i32, i32
  }
  func.func @transform_5(%arg0: i32) -> (i32, i32) {
    %c0_i32 = arith.constant 0 : i32
    %c0_i32_0 = arith.constant 0 : i32
    %c0_i32_1 = arith.constant 0 : i32
    return %c0_i32, %c0_i32_0 : i32, i32
  }
  func.func @transform_6(%arg0: i32) -> (i32, i32) {
    %c0_i32 = arith.constant 0 : i32
    %c0_i32_0 = arith.constant 0 : i32
    %c0_i32_1 = arith.constant 0 : i32
    return %c0_i32, %c0_i32_0 : i32, i32
  }
  func.func @transform_7(%arg0: i32) -> (i32, i32) {
    %c0_i32 = arith.constant 0 : i32
    %c0_i32_0 = arith.constant 0 : i32
    %c0_i32_1 = arith.constant 0 : i32
    return %c0_i32, %c0_i32_0 : i32, i32
  }
  func.func @transform_8(%arg0: i32) -> (i32, i32) {
    %c0_i32 = arith.constant 0 : i32
    %c0_i32_0 = arith.constant 0 : i32
    %c0_i32_1 = arith.constant 0 : i32
    return %c0_i32, %c0_i32_0 : i32, i32
  }
  func.func @transform_9(%arg0: i32) -> (i32, i32) {
    %c0_i32 = arith.constant 0 : i32
    %c0_i32_0 = arith.constant 0 : i32
    %c0_i32_1 = arith.constant 0 : i32
    return %c0_i32, %c0_i32_0 : i32, i32
  }
  func.func @transform_10(%arg0: i32) -> (i32, i32) {
    %c0_i32 = arith.constant 0 : i32
    %c0_i32_0 = arith.constant 0 : i32
    %c0_i32_1 = arith.constant 0 : i32
    return %c0_i32, %c0_i32_0 : i32, i32
  }
  func.func @transform_11(%arg0: i32) -> (i32, i32) {
    %c0_i32 = arith.constant 0 : i32
    %c0_i32_0 = arith.constant 0 : i32
    %c0_i32_1 = arith.constant 0 : i32
    return %c0_i32, %c0_i32_0 : i32, i32
  }
  func.func @transform_12(%arg0: i32) -> (i32, i32) {
    %c0_i32 = arith.constant 0 : i32
    %c0_i32_0 = arith.constant 0 : i32
    %c0_i32_1 = arith.constant 0 : i32
    return %c0_i32, %c0_i32_0 : i32, i32
  }
  func.func @transform_13(%arg0: i32) -> (i32, i32) {
    %c0_i32 = arith.constant 0 : i32
    %c0_i32_0 = arith.constant 0 : i32
    %c0_i32_1 = arith.constant 0 : i32
    return %c0_i32, %c0_i32_0 : i32, i32
  }
  func.func @transform_14(%arg0: i32) -> (i32, i32) {
    %c0_i32 = arith.constant 0 : i32
    %c0_i32_0 = arith.constant 0 : i32
    %c0_i32_1 = arith.constant 0 : i32
    return %c0_i32, %c0_i32_0 : i32, i32
  }
  func.func @transform_15(%arg0: i32) -> (i32, i32) {
    %c0_i32 = arith.constant 0 : i32
    %c0_i32_0 = arith.constant 0 : i32
    return %c0_i32, %arg0 : i32, i32
  }
}

</mosaic_0001>

<llo_original>
// kernel: reward_residual_block_1d.1
$region0: #{reward_residual_block_1d.1}
  #allocation0 [shape = 'u32[]', space=smem, size = 0x4, offset = 0x4, fixed_abs, tag = 'smem constant byte address 0x4 - core index']
  #allocation1 [shape = 'u32[144,128]{1,0:T(1,128)}', space=vmem, size = 0x12000, scoped, tag = 'internal scratch']
  %s0 = inlined_call_operand.vmem [shape: f32[8,256], index: 0, kind: input, shape index: {}]
  %s1 = inlined_call_operand.vmem [shape: bf16[32,32], index: 1, kind: input, shape index: {}]
  %s2 = inlined_call_operand.vmem [shape: f32[32,1], index: 2, kind: input, shape index: {}]
  %s3 = inlined_call_operand.vmem [shape: f32[16,1], index: 3, kind: input, shape index: {}]
  %s4 = inlined_call_operand.vmem [shape: f32[16,1], index: 4, kind: input, shape index: {}]
  %s5 = inlined_call_operand.vmem [shape: bf16[16,48], index: 5, kind: input, shape index: {}]
  %s6 = inlined_call_operand.vmem [shape: f32[16,1], index: 6, kind: input, shape index: {}]
  %s7 = inlined_call_operand.vmem [shape: f32[16,1], index: 7, kind: input, shape index: {}]
  %s8 = inlined_call_operand.vmem [shape: f32[16,1], index: 8, kind: input, shape index: {}]
  %s9 = inlined_call_operand.vmem [shape: f32[16,32], index: 9, kind: input, shape index: {}]
  %s10 = inlined_call_operand.vmem [shape: f32[32,16], index: 10, kind: input, shape index: {}]
  %s11 = inlined_call_operand.vmem [shape: f32[256,16], index: 11, kind: input, shape index: {}]
  %s12 = inlined_call_operand.vmem [shape: f32[16,256], index: 12, kind: input, shape index: {}]
  %s13 = inlined_call_operand.vmem [shape: f32[1,256], index: 13, kind: input, shape index: {}]
  %s14 = inlined_call_operand.vmem [shape: f32[1,256], index: 14, kind: input, shape index: {}]
  %s15 = inlined_call_operand.vmem [shape: f32[16,256], index: 15, kind: output, shape index: {}]
  %s16 = sld [smem:[#allocation0]]
  $region70: #{reward_residual_block_1d.1} parent=0
    _
  %s18 = ssub.s32 1, %s16
  %s19 = scalar_select 0, %s18, %s16
  // Predicated region
  $region2: #{reward_residual_block_1d.1} parent=0 // pred_check
    _
  $region3: #{reward_residual_block_1d.1} parent=0 // pred_check_branch
    %21 = sbr.rel (0) target = $region5
  $region4: #{reward_residual_block_1d.1} parent=0 // pred_region
    _
  $region5: #{reward_residual_block_1d.1} parent=0 // pred_fallthru
    _
  // Predicated region
  $region6: #{reward_residual_block_1d.1} parent=0 // pred_check
    _
  $region7: #{reward_residual_block_1d.1} parent=0 // pred_check_branch
    %23 = sbr.rel (0) target = $region9
  $region8: #{reward_residual_block_1d.1} parent=0 // pred_region
    _
  $region9: #{reward_residual_block_1d.1} parent=0 // pred_fallthru
    _
  // Predicated region
  $region10: #{reward_residual_block_1d.1} parent=0 // pred_check
    _
  $region11: #{reward_residual_block_1d.1} parent=0 // pred_check_branch
    %25 = sbr.rel (0) target = $region13
  $region12: #{reward_residual_block_1d.1} parent=0 // pred_region
    _
  $region13: #{reward_residual_block_1d.1} parent=0 // pred_fallthru
    _
  // Predicated region
  $region14: #{reward_residual_block_1d.1} parent=0 // pred_check
    _
  $region15: #{reward_residual_block_1d.1} parent=0 // pred_check_branch
    %27 = sbr.rel (0) target = $region17
  $region16: #{reward_residual_block_1d.1} parent=0 // pred_region
    _
  $region17: #{reward_residual_block_1d.1} parent=0 // pred_fallthru
    _
  // Predicated region
  $region18: #{reward_residual_block_1d.1} parent=0 // pred_check
    _
  $region19: #{reward_residual_block_1d.1} parent=0 // pred_check_branch
    %29 = sbr.rel (0) target = $region21
  $region20: #{reward_residual_block_1d.1} parent=0 // pred_region
    _
  $region21: #{reward_residual_block_1d.1} parent=0 // pred_fallthru
    _
  // Predicated region
  $region22: #{reward_residual_block_1d.1} parent=0 // pred_check
    _
  $region23: #{reward_residual_block_1d.1} parent=0 // pred_check_branch
    %31 = sbr.rel (0) target = $region25
  $region24: #{reward_residual_block_1d.1} parent=0 // pred_region
    _
  $region25: #{reward_residual_block_1d.1} parent=0 // pred_fallthru
    _
  // Predicated region
  $region26: #{reward_residual_block_1d.1} parent=0 // pred_check
    _
  $region27: #{reward_residual_block_1d.1} parent=0 // pred_check_branch
    %33 = sbr.rel (0) target = $region29
  $region28: #{reward_residual_block_1d.1} parent=0 // pred_region
    _
  $region29: #{reward_residual_block_1d.1} parent=0 // pred_fallthru
    _
  // Predicated region
  $region30: #{reward_residual_block_1d.1} parent=0 // pred_check
    _
  $region31: #{reward_residual_block_1d.1} parent=0 // pred_check_branch
    %35 = sbr.rel (0) target = $region33
  $region32: #{reward_residual_block_1d.1} parent=0 // pred_region
    _
  $region33: #{reward_residual_block_1d.1} parent=0 // pred_fallthru
    _
  // Predicated region
  $region34: #{reward_residual_block_1d.1} parent=0 // pred_check
    _
  $region35: #{reward_residual_block_1d.1} parent=0 // pred_check_branch
    %37 = sbr.rel (0) target = $region37
  $region36: #{reward_residual_block_1d.1} parent=0 // pred_region
    _
  $region37: #{reward_residual_block_1d.1} parent=0 // pred_fallthru
    _
  // Predicated region
  $region38: #{reward_residual_block_1d.1} parent=0 // pred_check
    _
  $region39: #{reward_residual_block_1d.1} parent=0 // pred_check_branch
    %39 = sbr.rel (0) target = $region41
  $region40: #{reward_residual_block_1d.1} parent=0 // pred_region
    _
  $region41: #{reward_residual_block_1d.1} parent=0 // pred_fallthru
    _
  // Predicated region
  $region42: #{reward_residual_block_1d.1} parent=0 // pred_check
    _
  $region43: #{reward_residual_block_1d.1} parent=0 // pred_check_branch
    %41 = sbr.rel (0) target = $region45
  $region44: #{reward_residual_block_1d.1} parent=0 // pred_region
    _
  $region45: #{reward_residual_block_1d.1} parent=0 // pred_fallthru
    _
  // Predicated region
  $region46: #{reward_residual_block_1d.1} parent=0 // pred_check
    _
  $region47: #{reward_residual_block_1d.1} parent=0 // pred_check_branch
    %43 = sbr.rel (0) target = $region49
  $region48: #{reward_residual_block_1d.1} parent=0 // pred_region
    _
  $region49: #{reward_residual_block_1d.1} parent=0 // pred_fallthru
    _
  // Predicated region
  $region50: #{reward_residual_block_1d.1} parent=0 // pred_check
    _
  $region51: #{reward_residual_block_1d.1} parent=0 // pred_check_branch
    %45 = sbr.rel (0) target = $region53
  $region52: #{reward_residual_block_1d.1} parent=0 // pred_region
    _
  $region53: #{reward_residual_block_1d.1} parent=0 // pred_fallthru
    _
  // Predicated region
  $region54: #{reward_residual_block_1d.1} parent=0 // pred_check
    _
  $region55: #{reward_residual_block_1d.1} parent=0 // pred_check_branch
    %47 = sbr.rel (0) target = $region57
  $region56: #{reward_residual_block_1d.1} parent=0 // pred_region
    _
  $region57: #{reward_residual_block_1d.1} parent=0 // pred_fallthru
    _
  // Predicated region
  $region58: #{reward_residual_block_1d.1} parent=0 // pred_check
    _
  $region59: #{reward_residual_block_1d.1} parent=0 // pred_check_branch
    %49 = sbr.rel (0) target = $region61
  $region60: #{reward_residual_block_1d.1} parent=0 // pred_region
    _
  $region61: #{reward_residual_block_1d.1} parent=0 // pred_fallthru
    _
  %v51 = vld [vmem:[%s0] sm:$0xff]
  %v52 = vld [vmem:[%s0 + $0x8] sm:$0xff]
  %v53 = vld [vmem:[%s13] sm:$0x3]
  %v54 = vld [vmem:[%s14] sm:$0x3]
  %v55 = vld [vmem:[%s1] sm:$0xf]
  %v56 = vld [vmem:[%s1 + $0x4] sm:$0xf]
  %v57 = vld [vmem:[%s1 + $0x8] sm:$0xf]
  %v58 = vld [vmem:[%s1 + $0xc] sm:$0xf]
  %v59 = vld [vmem:[%s2] sm:$0xff]
  %v60 = vld [vmem:[%s2 + $0x8] sm:$0xff]
  %v61 = vld [vmem:[%s2 + $0x10] sm:$0xff]
  %v62 = vld [vmem:[%s2 + $0x18] sm:$0xff]
  %63 = vrot.lane.b32.xlu0 %v51, 1
  %v64 = vpop.permute.xlu0 %63
  %65 = vrot.lane.b32.xlu0 %v52, 1
  %v66 = vpop.permute.xlu0 %65
  %v67 = vlaneseq
  %v68 = vand.u32 %v67, 127
  %vm69 = vcmp.lt.s32.totalorder %v68, 1
  %v70 = vsel %vm69, %v64, %v66
  %v71 = vsel %vm69, %v66, %v64
  %v73 = vlaneseq
  %v74 = vshrl.u32 %v73, 7
  %v75 = vsub.s32 0, %v74
  %v76 = vrot.slane %v53, %v75
  %v77 = vlaneseq
  %v78 = vshrl.u32 %v77, 7
  %v79 = vsub.s32 1, %v78
  %v80 = vrot.slane %v53, %v79
  %v83 = vmul.f32 %v71, %v76
  %v84 = vmul.f32 %v70, %v80
  %85 = vrot.lane.b32.xlu0 %v51, 127
  %v86 = vpop.permute.xlu0 %85
  %87 = vrot.lane.b32.xlu0 %v52, 127
  %v88 = vpop.permute.xlu0 %87
  %vm89 = vcmp.lt.s32.totalorder %v68, 127
  %v90 = vsel %vm89, %v86, %v88
  %v91 = vsel %vm89, %v88, %v86
  %v93 = vlaneseq
  %v94 = vshrl.u32 %v93, 7
  %v95 = vsub.s32 0, %v94
  %v96 = vrot.slane %v54, %v95
  %v97 = vlaneseq
  %v98 = vshrl.u32 %v97, 7
  %v99 = vsub.s32 1, %v98
  %v100 = vrot.slane %v54, %v99
  %v103 = vmul.f32 %v90, %v96
  %v104 = vmul.f32 %v91, %v100
  %v105 = vpack.c.bf16 %v51, %v83
  %v106 = vpack.c.bf16 %v52, %v84
  %v107 = vpack.c.bf16 %v103, %v103
  %v108 = vpack.c.bf16 %v104, %v104
  %vm109 = vcmask 1043456
  %v112 = vsel %vm109, %v107, 0
  %v115 = vsel %vm109, %v108, 0
  %118 = vset.pattern.permute.xlu0 0
  %119 = vperm.xlu0 %118, %v59
  %v120 = vpop.permute.xlu0 %119
  %123 = vset.pattern.permute.xlu0 0
  %124 = vperm.xlu0 %123, %v60
  %v125 = vpop.permute.xlu0 %124
  %128 = vset.pattern.permute.xlu0 0
  %129 = vperm.xlu0 %128, %v61
  %v130 = vpop.permute.xlu0 %129
  %133 = vset.pattern.permute.xlu0 0
  %134 = vperm.xlu0 %133, %v62
  %v135 = vpop.permute.xlu0 %134
  %v141 = vunpack.c.l.b16 %v55
  %v142 = vunpack.c.l.b16 %v56
  %v143 = vunpack.c.l.b16 %v57
  %v144 = vunpack.c.l.b16 %v58
  %v145 = vpack.c.b16 %v142, %v141
  %v146 = vpack.c.b16 %v144, %v143
  %vm147 = vcmask 261120
  %v149 = vsel %vm147, %v145, 0
  %v152 = vsel %vm147, %v146, 0
  %154 = vmatprep.subr.bf16.mxu0 %v106
  %155 = vmatpush1.bf16.msra.mxu0 %v105
  %156 = vmatprep.subr.bf16.mxu0 %v115
  %157 = vmatpush1.bf16.msra.mxu0 %v112
  %158 = vmatprep.subr.bf16.mxu0 0
  %159 = vmatpush1.bf16.msra.mxu0 0
  %160 = vmatprep.subr.bf16.mxu0 0
  %161 = vmatpush1.bf16.msra.mxu0 0
  %162 = vmatprep.subr.bf16.mxu0 0
  %163 = vmatpush1.bf16.msra.mxu0 0
  %164 = vmatprep.subr.bf16.mxu0 0
  %165 = vmatpush1.bf16.msra.mxu0 0
  %166 = vmatprep.subr.bf16.mxu0 0
  %167 = vmatpush1.bf16.msra.mxu0 0
  %168 = vmatprep.subr.bf16.mxu0 0
  %169 = vmatpush1.bf16.msra.mxu0 0
  %170 = vmatprep.subr.bf16.mxu0 0
  %171 = vmatpush1.bf16.msra.mxu0 0
  %172 = vmatprep.subr.bf16.mxu0 0
  %173 = vmatpush1.bf16.msra.mxu0 0
  %174 = vmatprep.subr.bf16.mxu0 0
  %175 = vmatpush1.bf16.msra.mxu0 0
  %176 = vmatprep.subr.bf16.mxu0 0
  %177 = vmatpush1.bf16.msra.mxu0 0
  %178 = vmatprep.subr.bf16.mxu0 0
  %179 = vmatpush1.bf16.msra.mxu0 0
  %180 = vmatprep.subr.bf16.mxu0 0
  %181 = vmatpush1.bf16.msra.mxu0 0
  %182 = vmatprep.subr.bf16.mxu0 0
  %183 = vmatpush1.bf16.msra.mxu0 0
  %184 = vmatprep.subr.bf16.mxu0 0
  %185 = vmatpush1.bf16.msra.mxu0 0
  %186 = vmatprep.mubr.bf16.mxu0 0
  %187 = vmatmul.mubr.bf16.gmra.mrb[0].mxu0 %v149
  %v188 = vpop.f32.mrb[0].mxu0
  %v189 = vadd.f32 %v120, %v188
  %v190 = vpop.f32.mrb[0].mxu0
  %v191 = vadd.f32 %v120, %v190
  %v192 = vpop.f32.mrb[0].mxu0
  %v193 = vadd.f32 %v125, %v192
  %v194 = vpop.f32.mrb[0].mxu0
  %v195 = vadd.f32 %v125, %v194
  %196 = vmatprep.mubr.bf16.mxu0 0
  %197 = vmatmul.mubr.bf16.gmra.mrb[0].mxu0 %v152
  %v198 = vpop.f32.mrb[0].mxu0
  %v199 = vadd.f32 %v130, %v198
  %v200 = vpop.f32.mrb[0].mxu0
  %v201 = vadd.f32 %v130, %v200
  %v202 = vpop.f32.mrb[0].mxu0
  %v203 = vadd.f32 %v135, %v202
  %v204 = vpop.f32.mrb[0].mxu0
  %v205 = vadd.f32 %v135, %v204
  %206 = vdwg.mxu0
  %v207 = vld [vmem:[%s3] sm:$0xff]
  %v208 = vld [vmem:[%s3 + $0x8] sm:$0xff]
  %v209 = vld [vmem:[%s4] sm:$0xff]
  %v210 = vld [vmem:[%s4 + $0x8] sm:$0xff]
  %v211 = vld [vmem:[%s9] sm:$0xff]
  %v212 = vld [vmem:[%s9 + $0x8] sm:$0xff]
  %v213 = vld [vmem:[%s10] sm:$0xff]
  %v214 = vld [vmem:[%s10 + $0x8] sm:$0xff]
  %v215 = vld [vmem:[%s10 + $0x10] sm:$0xff]
  %v216 = vld [vmem:[%s10 + $0x18] sm:$0xff]
  %v217 = vld [vmem:[%s11] sm:$0xff]
  %v218 = vld [vmem:[%s11 + $0x8] sm:$0xff]
  %v219 = vld [vmem:[%s11 + $0x10] sm:$0xff]
  %v220 = vld [vmem:[%s11 + $0x18] sm:$0xff]
  %v221 = vld [vmem:[%s11 + $0x20] sm:$0xff]
  %v222 = vld [vmem:[%s11 + $0x28] sm:$0xff]
  %v223 = vld [vmem:[%s11 + $0x30] sm:$0xff]
  %v224 = vld [vmem:[%s11 + $0x38] sm:$0xff]
  %v225 = vld [vmem:[%s11 + $0x40] sm:$0xff]
  %v226 = vld [vmem:[%s11 + $0x48] sm:$0xff]
  %v227 = vld [vmem:[%s11 + $0x50] sm:$0xff]
  %v228 = vld [vmem:[%s11 + $0x58] sm:$0xff]
  %v229 = vld [vmem:[%s11 + $0x60] sm:$0xff]
  %v230 = vld [vmem:[%s11 + $0x68] sm:$0xff]
  %v231 = vld [vmem:[%s11 + $0x70] sm:$0xff]
  %v232 = vld [vmem:[%s11 + $0x78] sm:$0xff]
  %v233 = vld [vmem:[%s11 + $0x80] sm:$0xff]
  %v234 = vld [vmem:[%s11 + $0x88] sm:$0xff]
  %v235 = vld [vmem:[%s11 + $0x90] sm:$0xff]
  %v236 = vld [vmem:[%s11 + $0x98] sm:$0xff]
  %v237 = vld [vmem:[%s11 + $0xa0] sm:$0xff]
  %v238 = vld [vmem:[%s11 + $0xa8] sm:$0xff]
  %v239 = vld [vmem:[%s11 + $0xb0] sm:$0xff]
  %v240 = vld [vmem:[%s11 + $0xb8] sm:$0xff]
  %v241 = vld [vmem:[%s11 + $0xc0] sm:$0xff]
  %v242 = vld [vmem:[%s11 + $0xc8] sm:$0xff]
  %v243 = vld [vmem:[%s11 + $0xd0] sm:$0xff]
  %v244 = vld [vmem:[%s11 + $0xd8] sm:$0xff]
  %v245 = vld [vmem:[%s11 + $0xe0] sm:$0xff]
  %v246 = vld [vmem:[%s11 + $0xe8] sm:$0xff]
  %v247 = vld [vmem:[%s11 + $0xf0] sm:$0xff]
  %v248 = vld [vmem:[%s11 + $0xf8] sm:$0xff]
  %v249 = vld [vmem:[%s12] sm:$0xff]
  %v250 = vld [vmem:[%s12 + $0x8] sm:$0xff]
  %v251 = vld [vmem:[%s12 + $0x10] sm:$0xff]
  %v252 = vld [vmem:[%s12 + $0x18] sm:$0xff]
  %v253 = vmul.f32 %v189, %v189
  %v254 = vmul.f32 %v191, %v191
  %v255 = vmul.f32 %v193, %v193
  %v256 = vmul.f32 %v195, %v195
  %v258 = vsel %vm147, %v211, 0
  %v261 = vsel %vm147, %v212, 0
  %263 = vmatprep.subr.mxu0 %v191
  %264 = vmatpush1.msra.mxu0 %v189
  %265 = vmatprep.subr.mxu0 %v195
  %266 = vmatpush1.msra.mxu0 %v193
  %267 = vmatprep.subr.mxu0 %v254
  %268 = vmatpush1.msra.mxu0 %v253
  %269 = vmatprep.subr.mxu0 %v256
  %270 = vmatpush1.msra.mxu0 %v255
  %271 = vmatprep.subr.mxu0 0.0
  %272 = vmatpush1.msra.mxu0 0.0
  %273 = vmatprep.subr.mxu0 0.0
  %274 = vmatpush1.msra.mxu0 0.0
  %275 = vmatprep.subr.mxu0 0.0
  %276 = vmatpush1.msra.mxu0 0.0
  %277 = vmatprep.subr.mxu0 0.0
  %278 = vmatpush1.msra.mxu0 0.0
  %279 = vmatprep.subr.mxu0 0.0
  %280 = vmatpush1.msra.mxu0 0.0
  %281 = vmatprep.subr.mxu0 0.0
  %282 = vmatpush1.msra.mxu0 0.0
  %283 = vmatprep.subr.mxu0 0.0
  %284 = vmatpush1.msra.mxu0 0.0
  %285 = vmatprep.subr.mxu0 0.0
  %286 = vmatpush1.msra.mxu0 0.0
  %287 = vmatprep.subr.mxu0 0.0
  %288 = vmatpush1.msra.mxu0 0.0
  %289 = vmatprep.subr.mxu0 0.0
  %290 = vmatpush1.msra.mxu0 0.0
  %291 = vmatprep.subr.mxu0 0.0
  %292 = vmatpush1.msra.mxu0 0.0
  %293 = vmatprep.subr.mxu0 0.0
  %294 = vmatpush1.msra.mxu0 0.0
  %295 = vmatprep.subr.mxu0 0.0
  %296 = vmatpush1.msra.mxu0 0.0
  %297 = vmatprep.subr.mxu0 0.0
  %298 = vmatpush1.msra.mxu0 0.0
  %299 = vmatprep.subr.mxu0 0.0
  %300 = vmatpush1.msra.mxu0 0.0
  %301 = vmatprep.subr.mxu0 0.0
  %302 = vmatpush1.msra.mxu0 0.0
  %303 = vmatprep.subr.mxu0 0.0
  %304 = vmatpush1.msra.mxu0 0.0
  %305 = vmatprep.subr.mxu0 0.0
  %306 = vmatpush1.msra.mxu0 0.0
  %307 = vmatprep.subr.mxu0 0.0
  %308 = vmatpush1.msra.mxu0 0.0
  %309 = vmatprep.subr.mxu0 0.0
  %310 = vmatpush1.msra.mxu0 0.0
  %311 = vmatprep.subr.mxu0 0.0
  %312 = vmatpush1.msra.mxu0 0.0
  %313 = vmatprep.subr.mxu0 0.0
  %314 = vmatpush1.msra.mxu0 0.0
  %315 = vmatprep.subr.mxu0 0.0
  %316 = vmatpush1.msra.mxu0 0.0
  %317 = vmatprep.subr.mxu0 0.0
  %318 = vmatpush1.msra.mxu0 0.0
  %319 = vmatprep.subr.mxu0 0.0
  %320 = vmatpush1.msra.mxu0 0.0
  %321 = vmatprep.subr.mxu0 0.0
  %322 = vmatpush1.msra.mxu0 0.0
  %323 = vmatprep.subr.mxu0 0.0
  %324 = vmatpush1.msra.mxu0 0.0
  %325 = vmatprep.subr.mxu0 0.0
  %326 = vmatpush1.msra.mxu0 0.0
  %327 = vmatprep.mubr.f32.mxu0 0.0
  %328 = vmatmul.mubr.f32.gmra.mrb[0].mxu0 %v258
  %v329 = vpop.f32.mrb[0].mxu0
  %v330 = vadd.f32 0.0, %v329
  %v331 = vpop.f32.mrb[0].mxu0
  %v332 = vadd.f32 0.0, %v331
  %333 = vmatprep.mubr.f32.mxu0 0.0
  %334 = vmatmul.mubr.f32.gmra.mrb[0].mxu0 %v261
  %v335 = vpop.f32.mrb[0].mxu0
  %v336 = vadd.f32 0.0, %v335
  %v337 = vpop.f32.mrb[0].mxu0
  %v338 = vadd.f32 0.0, %v337
  %339 = vdwg.mxu0
  %340 = vmatprep.subr.mxu0 0.0
  %341 = vmatpush1.msra.mxu0 %v217
  %342 = vmatprep.subr.mxu0 0.0
  %343 = vmatpush1.msra.mxu0 %v218
  %344 = vmatprep.subr.mxu0 0.0
  %345 = vmatpush1.msra.mxu0 %v219
  %346 = vmatprep.subr.mxu0 0.0
  %347 = vmatpush1.msra.mxu0 %v220
  %348 = vmatprep.subr.mxu0 0.0
  %349 = vmatpush1.msra.mxu0 %v221
  %350 = vmatprep.subr.mxu0 0.0
  %351 = vmatpush1.msra.mxu0 %v222
  %352 = vmatprep.subr.mxu0 0.0
  %353 = vmatpush1.msra.mxu0 %v223
  %354 = vmatprep.subr.mxu0 0.0
  %355 = vmatpush1.msra.mxu0 %v224
  %356 = vmatprep.subr.mxu0 0.0
  %357 = vmatpush1.msra.mxu0 %v225
  %358 = vmatprep.subr.mxu0 0.0
  %359 = vmatpush1.msra.mxu0 %v226
  %360 = vmatprep.subr.mxu0 0.0
  %361 = vmatpush1.msra.mxu0 %v227
  %362 = vmatprep.subr.mxu0 0.0
  %363 = vmatpush1.msra.mxu0 %v228
  %364 = vmatprep.subr.mxu0 0.0
  %365 = vmatpush1.msra.mxu0 %v229
  %366 = vmatprep.subr.mxu0 0.0
  %367 = vmatpush1.msra.mxu0 %v230
  %368 = vmatprep.subr.mxu0 0.0
  %369 = vmatpush1.msra.mxu0 %v231
  %370 = vmatprep.subr.mxu0 0.0
  %371 = vmatpush1.msra.mxu0 %v232
  %372 = vmatprep.subr.mxu0 0.0
  %373 = vmatpush1.msra.mxu0 %v233
  %374 = vmatprep.subr.mxu0 0.0
  %375 = vmatpush1.msra.mxu0 %v234
  %376 = vmatprep.subr.mxu0 0.0
  %377 = vmatpush1.msra.mxu0 %v235
  %378 = vmatprep.subr.mxu0 0.0
  %379 = vmatpush1.msra.mxu0 %v236
  %380 = vmatprep.subr.mxu0 0.0
  %381 = vmatpush1.msra.mxu0 %v237
  %382 = vmatprep.subr.mxu0 0.0
  %383 = vmatpush1.msra.mxu0 %v238
  %384 = vmatprep.subr.mxu0 0.0
  %385 = vmatpush1.msra.mxu0 %v239
  %386 = vmatprep.subr.mxu0 0.0
  %387 = vmatpush1.msra.mxu0 %v240
  %388 = vmatprep.subr.mxu0 0.0
  %389 = vmatpush1.msra.mxu0 %v241
  %390 = vmatprep.subr.mxu0 0.0
  %391 = vmatpush1.msra.mxu0 %v242
  %392 = vmatprep.subr.mxu0 0.0
  %393 = vmatpush1.msra.mxu0 %v243
  %394 = vmatprep.subr.mxu0 0.0
  %395 = vmatpush1.msra.mxu0 %v244
  %396 = vmatprep.subr.mxu0 0.0
  %397 = vmatpush1.msra.mxu0 %v245
  %398 = vmatprep.subr.mxu0 0.0
  %399 = vmatpush1.msra.mxu0 %v246
  %400 = vmatprep.subr.mxu0 0.0
  %401 = vmatpush1.msra.mxu0 %v247
  %402 = vmatprep.subr.mxu0 0.0
  %403 = vmatpush1.msra.mxu0 %v248
  %404 = vmatprep.mubr.f32.mxu0 %v332
  %405 = vmatmul.mubr.f32.gmra.mrb[0].mxu0 %v330
  %v406 = vpop.f32.mrb[0].mxu0
  %v407 = vadd.f32 0.0, %v406
  %v408 = vpop.f32.mrb[0].mxu0
  %409 = vmatprep.mubr.f32.mxu0 %v338
  %410 = vmatmul.mubr.f32.gmra.mrb[0].mxu0 %v336
  %v411 = vpop.f32.mrb[0].mxu0
  %v412 = vadd.f32 0.0, %v411
  %v413 = vpop.f32.mrb[0].mxu0
  %414 = vdwg.mxu0
  %v415 = vmul.f32 %v407, 0.03125
  %v416 = vmul.f32 %v412, 0.03125
  %v417 = vmul.f32 %v415, %v415
  %v418 = vsub.f32 %v416, %v417
  %v419 = vmax.f32 %v418, 0.0
  %v420 = vadd.f32 %v419, 1e-05
  %v421 = vrsqrt.pop %v420
  %v422 = vmul.f32 %v415, %v421
  %vm423 = vcmask 130048
  %v425 = vsel %vm423, %v213, 0
  %v428 = vsel %vm423, %v214, 0
  %v431 = vsel %vm423, %v215, 0
  %v434 = vsel %vm423, %v216, 0
  %436 = vmatprep.subr.mxu0 0.0
  %437 = vmatpush1.msra.mxu0 %v421
  %438 = vmatprep.subr.mxu0 0.0
  %439 = vmatpush1.msra.mxu0 %v422
  %440 = vmatprep.subr.mxu0 0.0
  %441 = vmatpush1.msra.mxu0 0.0
  %442 = vmatprep.subr.mxu0 0.0
  %443 = vmatpush1.msra.mxu0 0.0
  %444 = vmatprep.subr.mxu0 0.0
  %445 = vmatpush1.msra.mxu0 0.0
  %446 = vmatprep.subr.mxu0 0.0
  %447 = vmatpush1.msra.mxu0 0.0
  %448 = vmatprep.subr.mxu0 0.0
  %449 = vmatpush1.msra.mxu0 0.0
  %450 = vmatprep.subr.mxu0 0.0
  %451 = vmatpush1.msra.mxu0 0.0
  %452 = vmatprep.subr.mxu0 0.0
  %453 = vmatpush1.msra.mxu0 0.0
  %454 = vmatprep.subr.mxu0 0.0
  %455 = vmatpush1.msra.mxu0 0.0
  %456 = vmatprep.subr.mxu0 0.0
  %457 = vmatpush1.msra.mxu0 0.0
  %458 = vmatprep.subr.mxu0 0.0
  %459 = vmatpush1.msra.mxu0 0.0
  %460 = vmatprep.subr.mxu0 0.0
  %461 = vmatpush1.msra.mxu0 0.0
  %462 = vmatprep.subr.mxu0 0.0
  %463 = vmatpush1.msra.mxu0 0.0
  %464 = vmatprep.subr.mxu0 0.0
  %465 = vmatpush1.msra.mxu0 0.0
  %466 = vmatprep.subr.mxu0 0.0
  %467 = vmatpush1.msra.mxu0 0.0
  %468 = vmatprep.subr.mxu0 0.0
  %469 = vmatpush1.msra.mxu0 0.0
  %470 = vmatprep.subr.mxu0 0.0
  %471 = vmatpush1.msra.mxu0 0.0
  %472 = vmatprep.subr.mxu0 0.0
  %473 = vmatpush1.msra.mxu0 0.0
  %474 = vmatprep.subr.mxu0 0.0
  %475 = vmatpush1.msra.mxu0 0.0
  %476 = vmatprep.subr.mxu0 0.0
  %477 = vmatpush1.msra.mxu0 0.0
  %478 = vmatprep.subr.mxu0 0.0
  %479 = vmatpush1.msra.mxu0 0.0
  %480 = vmatprep.subr.mxu0 0.0
  %481 = vmatpush1.msra.mxu0 0.0
  %482 = vmatprep.subr.mxu0 0.0
  %483 = vmatpush1.msra.mxu0 0.0
  %484 = vmatprep.subr.mxu0 0.0
  %485 = vmatpush1.msra.mxu0 0.0
  %486 = vmatprep.subr.mxu0 0.0
  %487 = vmatpush1.msra.mxu0 0.0
  %488 = vmatprep.subr.mxu0 0.0
  %489 = vmatpush1.msra.mxu0 0.0
  %490 = vmatprep.subr.mxu0 0.0
  %491 = vmatpush1.msra.mxu0 0.0
  %492 = vmatprep.subr.mxu0 0.0
  %493 = vmatpush1.msra.mxu0 0.0
  %494 = vmatprep.subr.mxu0 0.0
  %495 = vmatpush1.msra.mxu0 0.0
  %496 = vmatprep.subr.mxu0 0.0
  %497 = vmatpush1.msra.mxu0 0.0
  %498 = vmatprep.subr.mxu0 0.0
  %499 = vmatpush1.msra.mxu0 0.0
  %500 = vmatprep.mubr.f32.mxu0 0.0
  %501 = vmatmul.mubr.f32.gmra.mrb[0].mxu0 %v425
  %v502 = vpop.f32.mrb[0].mxu0
  %v503 = vadd.f32 0.0, %v502
  %v504 = vpop.f32.mrb[0].mxu0
  %505 = vmatprep.mubr.f32.mxu0 0.0
  %506 = vmatmul.mubr.f32.gmra.mrb[0].mxu0 %v428
  %v507 = vpop.f32.mrb[0].mxu0
  %v508 = vadd.f32 0.0, %v507
  %v509 = vpop.f32.mrb[0].mxu0
  %510 = vmatprep.mubr.f32.mxu0 0.0
  %511 = vmatmul.mubr.f32.gmra.mrb[0].mxu0 %v431
  %v512 = vpop.f32.mrb[0].mxu0
  %v513 = vadd.f32 0.0, %v512
  %v514 = vpop.f32.mrb[0].mxu0
  %515 = vmatprep.mubr.f32.mxu0 0.0
  %516 = vmatmul.mubr.f32.gmra.mrb[0].mxu0 %v434
  %v517 = vpop.f32.mrb[0].mxu0
  %v518 = vadd.f32 0.0, %v517
  %v519 = vpop.f32.mrb[0].mxu0
  %520 = vdwg.mxu0
  %v522 = vsel %vm423, %v503, 0
  %v525 = vsel %vm423, %v508, 0
  %v528 = vsel %vm423, %v513, 0
  %v531 = vsel %vm423, %v518, 0
  %533 = vmatprep.subr.mxu0 %v250
  %534 = vmatpush1.msra.mxu0 %v249
  %535 = vmatprep.subr.mxu0 %v252
  %536 = vmatpush1.msra.mxu0 %v251
  %537 = vmatprep.subr.mxu0 0.0
  %538 = vmatpush1.msra.mxu0 0.0
  %539 = vmatprep.subr.mxu0 0.0
  %540 = vmatpush1.msra.mxu0 0.0
  %541 = vmatprep.subr.mxu0 0.0
  %542 = vmatpush1.msra.mxu0 0.0
  %543 = vmatprep.subr.mxu0 0.0
  %544 = vmatpush1.msra.mxu0 0.0
  %545 = vmatprep.subr.mxu0 0.0
  %546 = vmatpush1.msra.mxu0 0.0
  %547 = vmatprep.subr.mxu0 0.0
  %548 = vmatpush1.msra.mxu0 0.0
  %549 = vmatprep.subr.mxu0 0.0
  %550 = vmatpush1.msra.mxu0 0.0
  %551 = vmatprep.subr.mxu0 0.0
  %552 = vmatpush1.msra.mxu0 0.0
  %553 = vmatprep.subr.mxu0 0.0
  %554 = vmatpush1.msra.mxu0 0.0
  %555 = vmatprep.subr.mxu0 0.0
  %556 = vmatpush1.msra.mxu0 0.0
  %557 = vmatprep.subr.mxu0 0.0
  %558 = vmatpush1.msra.mxu0 0.0
  %559 = vmatprep.subr.mxu0 0.0
  %560 = vmatpush1.msra.mxu0 0.0
  %561 = vmatprep.subr.mxu0 0.0
  %562 = vmatpush1.msra.mxu0 0.0
  %563 = vmatprep.subr.mxu0 0.0
  %564 = vmatpush1.msra.mxu0 0.0
  %565 = vmatprep.subr.mxu0 0.0
  %566 = vmatpush1.msra.mxu0 0.0
  %567 = vmatprep.subr.mxu0 0.0
  %568 = vmatpush1.msra.mxu0 0.0
  %569 = vmatprep.subr.mxu0 0.0
  %570 = vmatpush1.msra.mxu0 0.0
  %571 = vmatprep.subr.mxu0 0.0
  %572 = vmatpush1.msra.mxu0 0.0
  %573 = vmatprep.subr.mxu0 0.0
  %574 = vmatpush1.msra.mxu0 0.0
  %575 = vmatprep.subr.mxu0 0.0
  %576 = vmatpush1.msra.mxu0 0.0
  %577 = vmatprep.subr.mxu0 0.0
  %578 = vmatpush1.msra.mxu0 0.0
  %579 = vmatprep.subr.mxu0 0.0
  %580 = vmatpush1.msra.mxu0 0.0
  %581 = vmatprep.subr.mxu0 0.0
  %582 = vmatpush1.msra.mxu0 0.0
  %583 = vmatprep.subr.mxu0 0.0
  %584 = vmatpush1.msra.mxu0 0.0
  %585 = vmatprep.subr.mxu0 0.0
  %586 = vmatpush1.msra.mxu0 0.0
  %587 = vmatprep.subr.mxu0 0.0
  %588 = vmatpush1.msra.mxu0 0.0
  %589 = vmatprep.subr.mxu0 0.0
  %590 = vmatpush1.msra.mxu0 0.0
  %591 = vmatprep.subr.mxu0 0.0
  %592 = vmatpush1.msra.mxu0 0.0
  %593 = vmatprep.subr.mxu0 0.0
  %594 = vmatpush1.msra.mxu0 0.0
  %595 = vmatprep.subr.mxu0 0.0
  %596 = vmatpush1.msra.mxu0 0.0
  %597 = vmatprep.mubr.f32.mxu0 0.0
  %598 = vmatmul.mubr.f32.gmra.mrb[0].mxu0 %v522
  %v599 = vpop.f32.mrb[0].mxu0
  %v600 = vadd.f32 0.0, %v599
  %v601 = vpop.f32.mrb[0].mxu0
  %v602 = vadd.f32 0.0, %v601
  %603 = vmatprep.mubr.f32.mxu0 0.0
  %604 = vmatmul.mubr.f32.gmra.mrb[0].mxu0 %v525
  %v605 = vpop.f32.mrb[0].mxu0
  %v606 = vadd.f32 0.0, %v605
  %v607 = vpop.f32.mrb[0].mxu0
  %v608 = vadd.f32 0.0, %v607
  %609 = vmatprep.mubr.f32.mxu0 0.0
  %610 = vmatmul.mubr.f32.gmra.mrb[0].mxu0 %v528
  %v611 = vpop.f32.mrb[0].mxu0
  %v612 = vadd.f32 0.0, %v611
  %v613 = vpop.f32.mrb[0].mxu0
  %v614 = vadd.f32 0.0, %v613
  %615 = vmatprep.mubr.f32.mxu0 0.0
  %616 = vmatmul.mubr.f32.gmra.mrb[0].mxu0 %v531
  %v617 = vpop.f32.mrb[0].mxu0
  %v618 = vadd.f32 0.0, %v617
  %v619 = vpop.f32.mrb[0].mxu0
  %v620 = vadd.f32 0.0, %v619
  %621 = vdwg.mxu0
  %v622 = vmul.f32 %v189, %v600
  %v623 = vmul.f32 %v191, %v602
  %v624 = vmul.f32 %v193, %v606
  %v625 = vmul.f32 %v195, %v608
  %v626 = vsub.f32 %v622, %v612
  %v627 = vsub.f32 %v623, %v614
  %v628 = vsub.f32 %v624, %v618
  %v629 = vsub.f32 %v625, %v620
  %631 = vset.pattern.permute.xlu0 0
  %632 = vperm.xlu0 %631, %v207
  %v633 = vpop.permute.xlu0 %632
  %636 = vset.pattern.permute.xlu0 0
  %637 = vperm.xlu0 %636, %v208
  %v638 = vpop.permute.xlu0 %637
  %v640 = vmul.f32 %v626, %v633
  %v641 = vmul.f32 %v627, %v633
  %v642 = vmul.f32 %v628, %v638
  %v643 = vmul.f32 %v629, %v638
  %645 = vset.pattern.permute.xlu0 0
  %646 = vperm.xlu0 %645, %v209
  %v647 = vpop.permute.xlu0 %646
  %650 = vset.pattern.permute.xlu0 0
  %651 = vperm.xlu0 %650, %v210
  %v652 = vpop.permute.xlu0 %651
  %v654 = vadd.f32 %v640, %v647
  %v655 = vadd.f32 %v641, %v647
  %v656 = vadd.f32 %v642, %v652
  %v657 = vadd.f32 %v643, %v652
  %v658 = vmin.f32 %v654, 20.0
  %v659 = vmin.f32 %v655, 20.0
  %v660 = vmin.f32 %v656, 20.0
  %v661 = vmin.f32 %v657, 20.0
  %v662 = vmul.f32 %v658, 1.442695
  %v663 = vpow.pop %v662
  %v664 = vmul.f32 %v659, 1.442695
  %v665 = vpow.pop %v664
  %v666 = vmul.f32 %v660, 1.442695
  %v667 = vpow.pop %v666
  %v668 = vmul.f32 %v661, 1.442695
  %v669 = vpow.pop %v668
  %v670 = vadd.f32 %v663, 2.0
  %v671 = vadd.f32 %v665, 2.0
  %v672 = vadd.f32 %v667, 2.0
  %v673 = vadd.f32 %v669, 2.0
  %v674 = vmul.f32 %v663, %v670
  %v675 = vmul.f32 %v665, %v671
  %v676 = vmul.f32 %v667, %v672
  %v677 = vmul.f32 %v669, %v673
  %v678 = vmul.f32 %v654, %v674
  %v679 = vmul.f32 %v655, %v675
  %v680 = vmul.f32 %v656, %v676
  %v681 = vmul.f32 %v657, %v677
  %v682 = vadd.f32 %v674, 2.0
  %v683 = vadd.f32 %v675, 2.0
  %v684 = vadd.f32 %v676, 2.0
  %v685 = vadd.f32 %v677, 2.0
  %v686 = vrcp.pop %v682
  %v687 = vrcp.pop %v683
  %v688 = vrcp.pop %v684
  %v689 = vrcp.pop %v685
  %v690 = vmul.f32 %v678, %v686
  %v691 = vmul.f32 %v679, %v687
  %v692 = vmul.f32 %v680, %v688
  %v693 = vmul.f32 %v681, %v689
  %vm694 = vcmp.gt.f32.partialorder %v654, 20.0
  %vm695 = vcmp.gt.f32.partialorder %v655, 20.0
  %vm696 = vcmp.gt.f32.partialorder %v656, 20.0
  %vm697 = vcmp.gt.f32.partialorder %v657, 20.0
  %v698 = vsel %vm694, %v654, %v690
  %v699 = vsel %vm695, %v655, %v691
  %v700 = vsel %vm696, %v656, %v692
  %v701 = vsel %vm697, %v657, %v693
  %v702 = vld [vmem:[%s5] sm:$0xf]
  %v703 = vld [vmem:[%s5 + $0x4] sm:$0xf]
  %v704 = vld [vmem:[%s6] sm:$0xff]
  %v705 = vld [vmem:[%s6 + $0x8] sm:$0xff]
  %706 = vrot.lane.b32.xlu0 %v698, 1
  %v707 = vpop.permute.xlu0 %706
  %708 = vrot.lane.b32.xlu0 %v700, 1
  %v709 = vpop.permute.xlu0 %708
  %710 = vrot.lane.b32.xlu0 %v699, 1
  %v711 = vpop.permute.xlu0 %710
  %712 = vrot.lane.b32.xlu0 %v701, 1
  %v713 = vpop.permute.xlu0 %712
  %v714 = vsel %vm69, %v707, %v711
  %v715 = vsel %vm69, %v709, %v713
  %v716 = vsel %vm69, %v711, %v707
  %v717 = vsel %vm69, %v713, %v709
  %v718 = vmul.f32 %v716, %v76
  %v719 = vmul.f32 %v714, %v80
  %v720 = vmul.f32 %v717, %v76
  %v721 = vmul.f32 %v715, %v80
  %722 = vrot.lane.b32.xlu0 %v698, 127
  %v723 = vpop.permute.xlu0 %722
  %724 = vrot.lane.b32.xlu0 %v700, 127
  %v725 = vpop.permute.xlu0 %724
  %726 = vrot.lane.b32.xlu0 %v699, 127
  %v727 = vpop.permute.xlu0 %726
  %728 = vrot.lane.b32.xlu0 %v701, 127
  %v729 = vpop.permute.xlu0 %728
  %v730 = vsel %vm89, %v723, %v727
  %v731 = vsel %vm89, %v725, %v729
  %v732 = vsel %vm89, %v727, %v723
  %v733 = vsel %vm89, %v729, %v725
  %v734 = vmul.f32 %v730, %v96
  %v735 = vmul.f32 %v732, %v100
  %v736 = vmul.f32 %v731, %v96
  %v737 = vmul.f32 %v733, %v100
  %v738 = vpack.c.bf16 %v720, %v718
  %v739 = vpack.c.bf16 %v721, %v719
  %v740 = vpack.c.bf16 %v700, %v698
  %v741 = vpack.c.bf16 %v701, %v699
  %v742 = vpack.c.bf16 %v736, %v734
  %v743 = vpack.c.bf16 %v737, %v735
  %745 = vset.pattern.permute.xlu0 0
  %746 = vperm.xlu0 %745, %v704
  %v747 = vpop.permute.xlu0 %746
  %750 = vset.pattern.permute.xlu0 0
  %751 = vperm.xlu0 %750, %v705
  %v752 = vpop.permute.xlu0 %751
  %v756 = vunpack.c.l.b16 %v702
  %v757 = vunpack.c.l.b16 %v703
  %v758 = vpack.c.b16 %v757, %v756
  %vm759 = vcmask 392192
  %v761 = vsel %vm759, %v758, 0
  %763 = vmatprep.subr.bf16.mxu0 %v739
  %764 = vmatpush1.bf16.msra.mxu0 %v738
  %765 = vmatprep.subr.bf16.mxu0 %v741
  %766 = vmatpush1.bf16.msra.mxu0 %v740
  %767 = vmatprep.subr.bf16.mxu0 %v743
  %768 = vmatpush1.bf16.msra.mxu0 %v742
  %769 = vmatprep.subr.bf16.mxu0 0
  %770 = vmatpush1.bf16.msra.mxu0 0
  %771 = vmatprep.subr.bf16.mxu0 0
  %772 = vmatpush1.bf16.msra.mxu0 0
  %773 = vmatprep.subr.bf16.mxu0 0
  %774 = vmatpush1.bf16.msra.mxu0 0
  %775 = vmatprep.subr.bf16.mxu0 0
  %776 = vmatpush1.bf16.msra.mxu0 0
  %777 = vmatprep.subr.bf16.mxu0 0
  %778 = vmatpush1.bf16.msra.mxu0 0
  %779 = vmatprep.subr.bf16.mxu0 0
  %780 = vmatpush1.bf16.msra.mxu0 0
  %781 = vmatprep.subr.bf16.mxu0 0
  %782 = vmatpush1.bf16.msra.mxu0 0
  %783 = vmatprep.subr.bf16.mxu0 0
  %784 = vmatpush1.bf16.msra.mxu0 0
  %785 = vmatprep.subr.bf16.mxu0 0
  %786 = vmatpush1.bf16.msra.mxu0 0
  %787 = vmatprep.subr.bf16.mxu0 0
  %788 = vmatpush1.bf16.msra.mxu0 0
  %789 = vmatprep.subr.bf16.mxu0 0
  %790 = vmatpush1.bf16.msra.mxu0 0
  %791 = vmatprep.subr.bf16.mxu0 0
  %792 = vmatpush1.bf16.msra.mxu0 0
  %793 = vmatprep.subr.bf16.mxu0 0
  %794 = vmatpush1.bf16.msra.mxu0 0
  %795 = vmatprep.mubr.bf16.mxu0 0
  %796 = vmatmul.mubr.bf16.gmra.mrb[0].mxu0 %v761
  %v797 = vpop.f32.mrb[0].mxu0
  %v798 = vadd.f32 %v747, %v797
  %v799 = vpop.f32.mrb[0].mxu0
  %v800 = vadd.f32 %v747, %v799
  %v801 = vpop.f32.mrb[0].mxu0
  %v802 = vadd.f32 %v752, %v801
  %v803 = vpop.f32.mrb[0].mxu0
  %v804 = vadd.f32 %v752, %v803
  %805 = vdwg.mxu0
  %v806 = vld [vmem:[%s7] sm:$0xff]
  %v807 = vld [vmem:[%s7 + $0x8] sm:$0xff]
  %v808 = vld [vmem:[%s8] sm:$0xff]
  %v809 = vld [vmem:[%s8 + $0x8] sm:$0xff]
  %v810 = vmul.f32 %v798, %v798
  %v811 = vmul.f32 %v800, %v800
  %v812 = vmul.f32 %v802, %v802
  %v813 = vmul.f32 %v804, %v804
  %814 = vmatprep.subr.mxu0 %v800
  %815 = vmatpush1.msra.mxu0 %v798
  %816 = vmatprep.subr.mxu0 %v804
  %817 = vmatpush1.msra.mxu0 %v802
  %818 = vmatprep.subr.mxu0 %v811
  %819 = vmatpush1.msra.mxu0 %v810
  %820 = vmatprep.subr.mxu0 %v813
  %821 = vmatpush1.msra.mxu0 %v812
  %822 = vmatprep.subr.mxu0 0.0
  %823 = vmatpush1.msra.mxu0 0.0
  %824 = vmatprep.subr.mxu0 0.0
  %825 = vmatpush1.msra.mxu0 0.0
  %826 = vmatprep.subr.mxu0 0.0
  %827 = vmatpush1.msra.mxu0 0.0
  %828 = vmatprep.subr.mxu0 0.0
  %829 = vmatpush1.msra.mxu0 0.0
  %830 = vmatprep.subr.mxu0 0.0
  %831 = vmatpush1.msra.mxu0 0.0
  %832 = vmatprep.subr.mxu0 0.0
  %833 = vmatpush1.msra.mxu0 0.0
  %834 = vmatprep.subr.mxu0 0.0
  %835 = vmatpush1.msra.mxu0 0.0
  %836 = vmatprep.subr.mxu0 0.0
  %837 = vmatpush1.msra.mxu0 0.0
  %838 = vmatprep.subr.mxu0 0.0
  %839 = vmatpush1.msra.mxu0 0.0
  %840 = vmatprep.subr.mxu0 0.0
  %841 = vmatpush1.msra.mxu0 0.0
  %842 = vmatprep.subr.mxu0 0.0
  %843 = vmatpush1.msra.mxu0 0.0
  %844 = vmatprep.subr.mxu0 0.0
  %845 = vmatpush1.msra.mxu0 0.0
  %846 = vmatprep.subr.mxu0 0.0
  %847 = vmatpush1.msra.mxu0 0.0
  %848 = vmatprep.subr.mxu0 0.0
  %849 = vmatpush1.msra.mxu0 0.0
  %850 = vmatprep.subr.mxu0 0.0
  %851 = vmatpush1.msra.mxu0 0.0
  %852 = vmatprep.subr.mxu0 0.0
  %853 = vmatpush1.msra.mxu0 0.0
  %854 = vmatprep.subr.mxu0 0.0
  %855 = vmatpush1.msra.mxu0 0.0
  %856 = vmatprep.subr.mxu0 0.0
  %857 = vmatpush1.msra.mxu0 0.0
  %858 = vmatprep.subr.mxu0 0.0
  %859 = vmatpush1.msra.mxu0 0.0
  %860 = vmatprep.subr.mxu0 0.0
  %861 = vmatpush1.msra.mxu0 0.0
  %862 = vmatprep.subr.mxu0 0.0
  %863 = vmatpush1.msra.mxu0 0.0
  %864 = vmatprep.subr.mxu0 0.0
  %865 = vmatpush1.msra.mxu0 0.0
  %866 = vmatprep.subr.mxu0 0.0
  %867 = vmatpush1.msra.mxu0 0.0
  %868 = vmatprep.subr.mxu0 0.0
  %869 = vmatpush1.msra.mxu0 0.0
  %870 = vmatprep.subr.mxu0 0.0
  %871 = vmatpush1.msra.mxu0 0.0
  %872 = vmatprep.subr.mxu0 0.0
  %873 = vmatpush1.msra.mxu0 0.0
  %874 = vmatprep.subr.mxu0 0.0
  %875 = vmatpush1.msra.mxu0 0.0
  %876 = vmatprep.subr.mxu0 0.0
  %877 = vmatpush1.msra.mxu0 0.0
  %878 = vmatprep.mubr.f32.mxu0 0.0
  %879 = vmatmul.mubr.f32.gmra.mrb[0].mxu0 %v258
  %v880 = vpop.f32.mrb[0].mxu0
  %v881 = vadd.f32 0.0, %v880
  %v882 = vpop.f32.mrb[0].mxu0
  %v883 = vadd.f32 0.0, %v882
  %884 = vmatprep.mubr.f32.mxu0 0.0
  %885 = vmatmul.mubr.f32.gmra.mrb[0].mxu0 %v261
  %v886 = vpop.f32.mrb[0].mxu0
  %v887 = vadd.f32 0.0, %v886
  %v888 = vpop.f32.mrb[0].mxu0
  %v889 = vadd.f32 0.0, %v888
  %890 = vdwg.mxu0
  %891 = vmatprep.subr.mxu0 0.0
  %892 = vmatpush1.msra.mxu0 %v217
  %893 = vmatprep.subr.mxu0 0.0
  %894 = vmatpush1.msra.mxu0 %v218
  %895 = vmatprep.subr.mxu0 0.0
  %896 = vmatpush1.msra.mxu0 %v219
  %897 = vmatprep.subr.mxu0 0.0
  %898 = vmatpush1.msra.mxu0 %v220
  %899 = vmatprep.subr.mxu0 0.0
  %900 = vmatpush1.msra.mxu0 %v221
  %901 = vmatprep.subr.mxu0 0.0
  %902 = vmatpush1.msra.mxu0 %v222
  %903 = vmatprep.subr.mxu0 0.0
  %904 = vmatpush1.msra.mxu0 %v223
  %905 = vmatprep.subr.mxu0 0.0
  %906 = vmatpush1.msra.mxu0 %v224
  %907 = vmatprep.subr.mxu0 0.0
  %908 = vmatpush1.msra.mxu0 %v225
  %909 = vmatprep.subr.mxu0 0.0
  %910 = vmatpush1.msra.mxu0 %v226
  %911 = vmatprep.subr.mxu0 0.0
  %912 = vmatpush1.msra.mxu0 %v227
  %913 = vmatprep.subr.mxu0 0.0
  %914 = vmatpush1.msra.mxu0 %v228
  %915 = vmatprep.subr.mxu0 0.0
  %916 = vmatpush1.msra.mxu0 %v229
  %917 = vmatprep.subr.mxu0 0.0
  %918 = vmatpush1.msra.mxu0 %v230
  %919 = vmatprep.subr.mxu0 0.0
  %920 = vmatpush1.msra.mxu0 %v231
  %921 = vmatprep.subr.mxu0 0.0
  %922 = vmatpush1.msra.mxu0 %v232
  %923 = vmatprep.subr.mxu0 0.0
  %924 = vmatpush1.msra.mxu0 %v233
  %925 = vmatprep.subr.mxu0 0.0
  %926 = vmatpush1.msra.mxu0 %v234
  %927 = vmatprep.subr.mxu0 0.0
  %928 = vmatpush1.msra.mxu0 %v235
  %929 = vmatprep.subr.mxu0 0.0
  %930 = vmatpush1.msra.mxu0 %v236
  %931 = vmatprep.subr.mxu0 0.0
  %932 = vmatpush1.msra.mxu0 %v237
  %933 = vmatprep.subr.mxu0 0.0
  %934 = vmatpush1.msra.mxu0 %v238
  %935 = vmatprep.subr.mxu0 0.0
  %936 = vmatpush1.msra.mxu0 %v239
  %937 = vmatprep.subr.mxu0 0.0
  %938 = vmatpush1.msra.mxu0 %v240
  %939 = vmatprep.subr.mxu0 0.0
  %940 = vmatpush1.msra.mxu0 %v241
  %941 = vmatprep.subr.mxu0 0.0
  %942 = vmatpush1.msra.mxu0 %v242
  %943 = vmatprep.subr.mxu0 0.0
  %944 = vmatpush1.msra.mxu0 %v243
  %945 = vmatprep.subr.mxu0 0.0
  %946 = vmatpush1.msra.mxu0 %v244
  %947 = vmatprep.subr.mxu0 0.0
  %948 = vmatpush1.msra.mxu0 %v245
  %949 = vmatprep.subr.mxu0 0.0
  %950 = vmatpush1.msra.mxu0 %v246
  %951 = vmatprep.subr.mxu0 0.0
  %952 = vmatpush1.msra.mxu0 %v247
  %953 = vmatprep.subr.mxu0 0.0
  %954 = vmatpush1.msra.mxu0 %v248
  %955 = vmatprep.mubr.f32.mxu0 %v883
  %956 = vmatmul.mubr.f32.gmra.mrb[0].mxu0 %v881
  %v957 = vpop.f32.mrb[0].mxu0
  %v958 = vadd.f32 0.0, %v957
  %v959 = vpop.f32.mrb[0].mxu0
  %960 = vmatprep.mubr.f32.mxu0 %v889
  %961 = vmatmul.mubr.f32.gmra.mrb[0].mxu0 %v887
  %v962 = vpop.f32.mrb[0].mxu0
  %v963 = vadd.f32 0.0, %v962
  %v964 = vpop.f32.mrb[0].mxu0
  %965 = vdwg.mxu0
  %v966 = vmul.f32 %v958, 0.03125
  %v967 = vmul.f32 %v963, 0.03125
  %v968 = vmul.f32 %v966, %v966
  %v969 = vsub.f32 %v967, %v968
  %v970 = vmax.f32 %v969, 0.0
  %v971 = vadd.f32 %v970, 1e-05
  %v972 = vrsqrt.pop %v971
  %v973 = vmul.f32 %v966, %v972
  %974 = vmatprep.subr.mxu0 0.0
  %975 = vmatpush1.msra.mxu0 %v972
  %976 = vmatprep.subr.mxu0 0.0
  %977 = vmatpush1.msra.mxu0 %v973
  %978 = vmatprep.subr.mxu0 0.0
  %979 = vmatpush1.msra.mxu0 0.0
  %980 = vmatprep.subr.mxu0 0.0
  %981 = vmatpush1.msra.mxu0 0.0
  %982 = vmatprep.subr.mxu0 0.0
  %983 = vmatpush1.msra.mxu0 0.0
  %984 = vmatprep.subr.mxu0 0.0
  %985 = vmatpush1.msra.mxu0 0.0
  %986 = vmatprep.subr.mxu0 0.0
  %987 = vmatpush1.msra.mxu0 0.0
  %988 = vmatprep.subr.mxu0 0.0
  %989 = vmatpush1.msra.mxu0 0.0
  %990 = vmatprep.subr.mxu0 0.0
  %991 = vmatpush1.msra.mxu0 0.0
  %992 = vmatprep.subr.mxu0 0.0
  %993 = vmatpush1.msra.mxu0 0.0
  %994 = vmatprep.subr.mxu0 0.0
  %995 = vmatpush1.msra.mxu0 0.0
  %996 = vmatprep.subr.mxu0 0.0
  %997 = vmatpush1.msra.mxu0 0.0
  %998 = vmatprep.subr.mxu0 0.0
  %999 = vmatpush1.msra.mxu0 0.0
  %1000 = vmatprep.subr.mxu0 0.0
  %1001 = vmatpush1.msra.mxu0 0.0
  %1002 = vmatprep.subr.mxu0 0.0
  %1003 = vmatpush1.msra.mxu0 0.0
  %1004 = vmatprep.subr.mxu0 0.0
  %1005 = vmatpush1.msra.mxu0 0.0
  %1006 = vmatprep.subr.mxu0 0.0
  %1007 = vmatpush1.msra.mxu0 0.0
  %1008 = vmatprep.subr.mxu0 0.0
  %1009 = vmatpush1.msra.mxu0 0.0
  %1010 = vmatprep.subr.mxu0 0.0
  %1011 = vmatpush1.msra.mxu0 0.0
  %1012 = vmatprep.subr.mxu0 0.0
  %1013 = vmatpush1.msra.mxu0 0.0
  %1014 = vmatprep.subr.mxu0 0.0
  %1015 = vmatpush1.msra.mxu0 0.0
  %1016 = vmatprep.subr.mxu0 0.0
  %1017 = vmatpush1.msra.mxu0 0.0
  %1018 = vmatprep.subr.mxu0 0.0
  %1019 = vmatpush1.msra.mxu0 0.0
  %1020 = vmatprep.subr.mxu0 0.0
  %1021 = vmatpush1.msra.mxu0 0.0
  %1022 = vmatprep.subr.mxu0 0.0
  %1023 = vmatpush1.msra.mxu0 0.0
  %1024 = vmatprep.subr.mxu0 0.0
  %1025 = vmatpush1.msra.mxu0 0.0
  %1026 = vmatprep.subr.mxu0 0.0
  %1027 = vmatpush1.msra.mxu0 0.0
  %1028 = vmatprep.subr.mxu0 0.0
  %1029 = vmatpush1.msra.mxu0 0.0
  %1030 = vmatprep.subr.mxu0 0.0
  %1031 = vmatpush1.msra.mxu0 0.0
  %1032 = vmatprep.subr.mxu0 0.0
  %1033 = vmatpush1.msra.mxu0 0.0
  %1034 = vmatprep.subr.mxu0 0.0
  %1035 = vmatpush1.msra.mxu0 0.0
  %1036 = vmatprep.subr.mxu0 0.0
  %1037 = vmatpush1.msra.mxu0 0.0
  %1038 = vmatprep.mubr.f32.mxu0 0.0
  %1039 = vmatmul.mubr.f32.gmra.mrb[0].mxu0 %v425
  %v1040 = vpop.f32.mrb[0].mxu0
  %v1041 = vadd.f32 0.0, %v1040
  %v1042 = vpop.f32.mrb[0].mxu0
  %1043 = vmatprep.mubr.f32.mxu0 0.0
  %1044 = vmatmul.mubr.f32.gmra.mrb[0].mxu0 %v428
  %v1045 = vpop.f32.mrb[0].mxu0
  %v1046 = vadd.f32 0.0, %v1045
  %v1047 = vpop.f32.mrb[0].mxu0
  %1048 = vmatprep.mubr.f32.mxu0 0.0
  %1049 = vmatmul.mubr.f32.gmra.mrb[0].mxu0 %v431
  %v1050 = vpop.f32.mrb[0].mxu0
  %v1051 = vadd.f32 0.0, %v1050
  %v1052 = vpop.f32.mrb[0].mxu0
  %1053 = vmatprep.mubr.f32.mxu0 0.0
  %1054 = vmatmul.mubr.f32.gmra.mrb[0].mxu0 %v434
  %v1055 = vpop.f32.mrb[0].mxu0
  %v1056 = vadd.f32 0.0, %v1055
  %v1057 = vpop.f32.mrb[0].mxu0
  %1058 = vdwg.mxu0
  %v1060 = vsel %vm423, %v1041, 0
  %v1063 = vsel %vm423, %v1046, 0
  %v1066 = vsel %vm423, %v1051, 0
  %v1069 = vsel %vm423, %v1056, 0
  %1071 = vmatprep.subr.mxu0 %v250
  %1072 = vmatpush1.msra.mxu0 %v249
  %1073 = vmatprep.subr.mxu0 %v252
  %1074 = vmatpush1.msra.mxu0 %v251
  %1075 = vmatprep.subr.mxu0 0.0
  %1076 = vmatpush1.msra.mxu0 0.0
  %1077 = vmatprep.subr.mxu0 0.0
  %1078 = vmatpush1.msra.mxu0 0.0
  %1079 = vmatprep.subr.mxu0 0.0
  %1080 = vmatpush1.msra.mxu0 0.0
  %1081 = vmatprep.subr.mxu0 0.0
  %1082 = vmatpush1.msra.mxu0 0.0
  %1083 = vmatprep.subr.mxu0 0.0
  %1084 = vmatpush1.msra.mxu0 0.0
  %1085 = vmatprep.subr.mxu0 0.0
  %1086 = vmatpush1.msra.mxu0 0.0
  %1087 = vmatprep.subr.mxu0 0.0
  %1088 = vmatpush1.msra.mxu0 0.0
  %1089 = vmatprep.subr.mxu0 0.0
  %1090 = vmatpush1.msra.mxu0 0.0
  %1091 = vmatprep.subr.mxu0 0.0
  %1092 = vmatpush1.msra.mxu0 0.0
  %1093 = vmatprep.subr.mxu0 0.0
  %1094 = vmatpush1.msra.mxu0 0.0
  %1095 = vmatprep.subr.mxu0 0.0
  %1096 = vmatpush1.msra.mxu0 0.0
  %1097 = vmatprep.subr.mxu0 0.0
  %1098 = vmatpush1.msra.mxu0 0.0
  %1099 = vmatprep.subr.mxu0 0.0
  %1100 = vmatpush1.msra.mxu0 0.0
  %1101 = vmatprep.subr.mxu0 0.0
  %1102 = vmatpush1.msra.mxu0 0.0
  %1103 = vmatprep.subr.mxu0 0.0
  %1104 = vmatpush1.msra.mxu0 0.0
  %1105 = vmatprep.subr.mxu0 0.0
  %1106 = vmatpush1.msra.mxu0 0.0
  %1107 = vmatprep.subr.mxu0 0.0
  %1108 = vmatpush1.msra.mxu0 0.0
  %1109 = vmatprep.subr.mxu0 0.0
  %1110 = vmatpush1.msra.mxu0 0.0
  %1111 = vmatprep.subr.mxu0 0.0
  %1112 = vmatpush1.msra.mxu0 0.0
  %1113 = vmatprep.subr.mxu0 0.0
  %1114 = vmatpush1.msra.mxu0 0.0
  %1115 = vmatprep.subr.mxu0 0.0
  %1116 = vmatpush1.msra.mxu0 0.0
  %1117 = vmatprep.subr.mxu0 0.0
  %1118 = vmatpush1.msra.mxu0 0.0
  %1119 = vmatprep.subr.mxu0 0.0
  %1120 = vmatpush1.msra.mxu0 0.0
  %1121 = vmatprep.subr.mxu0 0.0
  %1122 = vmatpush1.msra.mxu0 0.0
  %1123 = vmatprep.subr.mxu0 0.0
  %1124 = vmatpush1.msra.mxu0 0.0
  %1125 = vmatprep.subr.mxu0 0.0
  %1126 = vmatpush1.msra.mxu0 0.0
  %1127 = vmatprep.subr.mxu0 0.0
  %1128 = vmatpush1.msra.mxu0 0.0
  %1129 = vmatprep.subr.mxu0 0.0
  %1130 = vmatpush1.msra.mxu0 0.0
  %1131 = vmatprep.subr.mxu0 0.0
  %1132 = vmatpush1.msra.mxu0 0.0
  %1133 = vmatprep.subr.mxu0 0.0
  %1134 = vmatpush1.msra.mxu0 0.0
  %1135 = vmatprep.mubr.f32.mxu0 0.0
  %1136 = vmatmul.mubr.f32.gmra.mrb[0].mxu0 %v1060
  %v1137 = vpop.f32.mrb[0].mxu0
  %v1138 = vadd.f32 0.0, %v1137
  %v1139 = vpop.f32.mrb[0].mxu0
  %v1140 = vadd.f32 0.0, %v1139
  %1141 = vmatprep.mubr.f32.mxu0 0.0
  %1142 = vmatmul.mubr.f32.gmra.mrb[0].mxu0 %v1063
  %v1143 = vpop.f32.mrb[0].mxu0
  %v1144 = vadd.f32 0.0, %v1143
  %v1145 = vpop.f32.mrb[0].mxu0
  %v1146 = vadd.f32 0.0, %v1145
  %1147 = vmatprep.mubr.f32.mxu0 0.0
  %1148 = vmatmul.mubr.f32.gmra.mrb[0].mxu0 %v1066
  %v1149 = vpop.f32.mrb[0].mxu0
  %v1150 = vadd.f32 0.0, %v1149
  %v1151 = vpop.f32.mrb[0].mxu0
  %v1152 = vadd.f32 0.0, %v1151
  %1153 = vmatprep.mubr.f32.mxu0 0.0
  %1154 = vmatmul.mubr.f32.gmra.mrb[0].mxu0 %v1069
  %v1155 = vpop.f32.mrb[0].mxu0
  %v1156 = vadd.f32 0.0, %v1155
  %v1157 = vpop.f32.mrb[0].mxu0
  %v1158 = vadd.f32 0.0, %v1157
  %1159 = vdwg.mxu0
  %v1160 = vmul.f32 %v798, %v1138
  %v1161 = vmul.f32 %v800, %v1140
  %v1162 = vmul.f32 %v802, %v1144
  %v1163 = vmul.f32 %v804, %v1146
  %v1164 = vsub.f32 %v1160, %v1150
  %v1165 = vsub.f32 %v1161, %v1152
  %v1166 = vsub.f32 %v1162, %v1156
  %v1167 = vsub.f32 %v1163, %v1158
  %1169 = vset.pattern.permute.xlu0 0
  %1170 = vperm.xlu0 %1169, %v806
  %v1171 = vpop.permute.xlu0 %1170
  %1174 = vset.pattern.permute.xlu0 0
  %1175 = vperm.xlu0 %1174, %v807
  %v1176 = vpop.permute.xlu0 %1175
  %v1178 = vmul.f32 %v1164, %v1171
  %v1179 = vmul.f32 %v1165, %v1171
  %v1180 = vmul.f32 %v1166, %v1176
  %v1181 = vmul.f32 %v1167, %v1176
  %1183 = vset.pattern.permute.xlu0 0
  %1184 = vperm.xlu0 %1183, %v808
  %v1185 = vpop.permute.xlu0 %1184
  %1188 = vset.pattern.permute.xlu0 0
  %1189 = vperm.xlu0 %1188, %v809
  %v1190 = vpop.permute.xlu0 %1189
  %v1192 = vadd.f32 %v1178, %v1185
  %v1193 = vadd.f32 %v1179, %v1185
  %v1194 = vadd.f32 %v1180, %v1190
  %v1195 = vadd.f32 %v1181, %v1190
  %v1196 = vmin.f32 %v1192, 20.0
  %v1197 = vmin.f32 %v1193, 20.0
  %v1198 = vmin.f32 %v1194, 20.0
  %v1199 = vmin.f32 %v1195, 20.0
  %v1200 = vmul.f32 %v1196, 1.442695
  %v1201 = vpow.pop %v1200
  %v1202 = vmul.f32 %v1197, 1.442695
  %v1203 = vpow.pop %v1202
  %v1204 = vmul.f32 %v1198, 1.442695
  %v1205 = vpow.pop %v1204
  %v1206 = vmul.f32 %v1199, 1.442695
  %v1207 = vpow.pop %v1206
  %v1208 = vadd.f32 %v1201, 2.0
  %v1209 = vadd.f32 %v1203, 2.0
  %v1210 = vadd.f32 %v1205, 2.0
  %v1211 = vadd.f32 %v1207, 2.0
  %v1212 = vmul.f32 %v1201, %v1208
  %v1213 = vmul.f32 %v1203, %v1209
  %v1214 = vmul.f32 %v1205, %v1210
  %v1215 = vmul.f32 %v1207, %v1211
  %v1216 = vmul.f32 %v1192, %v1212
  %v1217 = vmul.f32 %v1193, %v1213
  %v1218 = vmul.f32 %v1194, %v1214
  %v1219 = vmul.f32 %v1195, %v1215
  %v1220 = vadd.f32 %v1212, 2.0
  %v1221 = vadd.f32 %v1213, 2.0
  %v1222 = vadd.f32 %v1214, 2.0
  %v1223 = vadd.f32 %v1215, 2.0
  %v1224 = vrcp.pop %v1220
  %v1225 = vrcp.pop %v1221
  %v1226 = vrcp.pop %v1222
  %v1227 = vrcp.pop %v1223
  %v1228 = vmul.f32 %v1216, %v1224
  %v1229 = vmul.f32 %v1217, %v1225
  %v1230 = vmul.f32 %v1218, %v1226
  %v1231 = vmul.f32 %v1219, %v1227
  %vm1232 = vcmp.gt.f32.partialorder %v1192, 20.0
  %vm1233 = vcmp.gt.f32.partialorder %v1193, 20.0
  %vm1234 = vcmp.gt.f32.partialorder %v1194, 20.0
  %vm1235 = vcmp.gt.f32.partialorder %v1195, 20.0
  %v1236 = vsel %vm1232, %v1192, %v1228
  %v1237 = vsel %vm1233, %v1193, %v1229
  %v1238 = vsel %vm1234, %v1194, %v1230
  %v1239 = vsel %vm1235, %v1195, %v1231
  %v1240 = vadd.f32 %v1236, %v199
  %v1241 = vadd.f32 %v1237, %v201
  %v1242 = vadd.f32 %v1238, %v203
  %v1243 = vadd.f32 %v1239, %v205
  %1244 = vst [vmem:[%s15] sm:$0xff] %v1240
  %1245 = vst [vmem:[%s15 + $0x8] sm:$0xff] %v1241
  %1246 = vst [vmem:[%s15 + $0x10] sm:$0xff] %v1242
  %1247 = vst [vmem:[%s15 + $0x18] sm:$0xff] %v1243
  // Predicated region
  $region62: #{reward_residual_block_1d.1} parent=0 // pred_check
    _
  $region63: #{reward_residual_block_1d.1} parent=0 // pred_check_branch
    %1249 = sbr.rel (0) target = $region65
  $region64: #{reward_residual_block_1d.1} parent=0 // pred_region
    _
  $region65: #{reward_residual_block_1d.1} parent=0 // pred_fallthru
    _
  // Predicated region
  $region66: #{reward_residual_block_1d.1} parent=0 // pred_check
    _
  $region67: #{reward_residual_block_1d.1} parent=0 // pred_check_branch
    %1251 = sbr.rel (0) target = $region69
  $region68: #{reward_residual_block_1d.1} parent=0 // pred_region
    _
  $region69: #{reward_residual_block_1d.1} parent=0 // pred_fallthru
    _

</llo_original>
